<compile_context>
chip_gen: v7x
topology: tpu7x:2x2x1
jax: 0.10.0
libtpu: 0.0.40
codegen_flags: <defaults>
</compile_context>

<pallas_src>
import math

import jax
import jax.numpy as jnp
from jax.experimental import pallas as pl
from jax.experimental.pallas import tpu as pltpu

C_IN = 3          # RGB input to DRNSeg
C_FEAT = 32       # stand-in for drn model.out_dim (small for the demo)
CLASSES = 19      # fixed by regression_head(in_channels=19, ...)
REG_OUT = 2       # regression_head out_channels
C_ALL = CLASSES + REG_OUT
UP_K, UP_S, UP_P = 16, 8, 4   # ConvTranspose2d(classes, classes, 16, stride=8, padding=4)

VMEM_LIMIT = 48 * 1024 * 1024   # v7x-safe (64 MiB total); v5e/v6e could raise further


# ------------------------------------------------------------------ kernels --

def _base_seg_kernel(x_ref, wb_ref, bb_ref, wc_ref, bc_ref, o_ref):
    # Fused base-stub + (seg ⊕ folded reg-head) 1x1 conv for one row tile:
    #   (TM, 192)bf16 @ (192, 32)bf16 -> relu -> @ (32, 21)bf16, f32 accumulation.
    # feat never leaves VMEM/vregs.
    feat = jnp.dot(x_ref[...], wb_ref[...], preferred_element_type=jnp.float32)
    feat = jnp.maximum(feat + bb_ref[...], 0.0)
    out = jnp.dot(feat.astype(jnp.bfloat16), wc_ref[...],
                  preferred_element_type=jnp.float32) + bc_ref[...]
    o_ref[...] = out.astype(o_ref.dtype)


def _up_head_kernel(seg_ref, uh_ref, uwT_ref, breg_ref, o_ref, t_ref):
    # seg_ref : (1, 21, Hs, Ws) bf16   low-res (seg | folded reg) logits, channel-major
    # uh_ref  : (TH, Hs)        bf16   bilinear H-upsample rows for this h tile
    # uwT_ref : (Ws, TW)        bf16   bilinear W-upsample columns for this w tile
    # breg_ref: (1, 2) f32 SMEM        regression bias (added AFTER upsampling)
    # o_ref   : (1, 21, TH, TW) f32    NCHW output tile (W on lanes -> lane-dense stores)
    # t_ref   : (21, TH, Ws)    bf16   VMEM scratch: H-upsampled slab, carried across
    #                                  the (innermost, "arbitrary") W grid axis.
    C21, TH, Ws = t_ref.shape
    Hs = uh_ref.shape[1]

    # Step 1 (H upsample) -- only when the w tile index restarts; the result is
    # tile-invariant along W, so it is computed once per (n, h) and carried.
    @pl.when(pl.program_id(2) == 0)
    def _():
        uh_b = jnp.broadcast_to(uh_ref[...], (C21, TH, Hs))
        t = jnp.einsum("cth,chw->ctw", uh_b, seg_ref[0],
                       preferred_element_type=jnp.float32)          # (21, TH, Ws)
        t_ref[...] = t.astype(t_ref.dtype)

    # Step 2 (W upsample): one big lane-dense matmul, channels stacked on sublanes.
    t2 = t_ref[...].reshape(C21 * TH, Ws)
    y = jnp.dot(t2, uwT_ref[...], preferred_element_type=jnp.float32)  # (21*TH, TW)
    y = y.reshape(C21, TH, o_ref.shape[-1])

    # log-softmax over the channel axis (leading axis -> pure VPU, no XLU).
    ys = y[:CLASSES]
    m = jnp.max(ys, axis=0, keepdims=True)
    e = jnp.exp(ys - m)
    lse = m + jnp.log(jnp.sum(e, axis=0, keepdims=True))
    o_ref[0, :CLASSES] = ys - lse

    # regression channels: just add the bias (head itself was folded to low res).
    for r in range(REG_OUT):
        o_ref[0, CLASSES + r] = y[CLASSES + r] + breg_ref[0, r]


# ----------------------------------------------------------------- wrappers --

def _base_seg(xp, w_base, b_base, w_comb, b_comb):
    # xp: (M, 192) bf16 -> low-res (seg | reg) logits (M, 21) bf16, row-tiled.
    M, K = xp.shape
    TM = M if M <= 2048 else 2048
    grid = (pl.cdiv(M, TM),)
    return pl.pallas_call(
        _base_seg_kernel,
        out_shape=jax.ShapeDtypeStruct((M, C_ALL), jnp.bfloat16),
        grid=grid,
        in_specs=[
            pl.BlockSpec((TM, K), lambda i: (i, 0)),
            pl.BlockSpec((K, C_FEAT), lambda i: (0, 0)),
            pl.BlockSpec((1, C_FEAT), lambda i: (0, 0)),
            pl.BlockSpec((C_FEAT, C_ALL), lambda i: (0, 0)),
            pl.BlockSpec((1, C_ALL), lambda i: (0, 0)),
        ],
        out_specs=pl.BlockSpec((TM, C_ALL), lambda i: (i, 0)),
        compiler_params=pltpu.CompilerParams(
            dimension_semantics=("parallel",),
            vmem_limit_bytes=VMEM_LIMIT),
    )(xp, w_base, b_base, w_comb, b_comb)


def _upsample_head(seg_lo, uh, uwT, b_reg):
    # seg_lo: (N, 21, Hs, Ws) bf16, uh: (H, Hs) bf16, uwT: (Ws, W) bf16
    # -> out (N, 21, H, W) f32 NCHW.
    N, C21, Hs, Ws = seg_lo.shape
    H, W = uh.shape[0], uwT.shape[1]
    TH = H if H <= 128 else 128            # multiple of 8 (or full H)
    TW = W if W <= 512 else 512            # multiple of 128 (or full W)
    grid = (N, pl.cdiv(H, TH), pl.cdiv(W, TW))
    return pl.pallas_call(
        _up_head_kernel,
        out_shape=jax.ShapeDtypeStruct((N, C21, H, W), jnp.float32),
        grid=grid,
        in_specs=[
            pl.BlockSpec((1, C21, Hs, Ws), lambda n, h, w: (n, 0, 0, 0)),
            pl.BlockSpec((TH, Hs), lambda n, h, w: (h, 0)),
            pl.BlockSpec((Ws, TW), lambda n, h, w: (0, w)),
            pl.BlockSpec(memory_space=pltpu.MemorySpace.SMEM),   # b_reg (1, 2)
        ],
        out_specs=pl.BlockSpec((1, C21, TH, TW), lambda n, h, w: (n, 0, h, w)),
        scratch_shapes=[pltpu.VMEM((C21, TH, Ws), jnp.bfloat16)],
        compiler_params=pltpu.CompilerParams(
            dimension_semantics=("parallel", "parallel", "arbitrary"),
            vmem_limit_bytes=VMEM_LIMIT),
    )(seg_lo, uh, uwT, b_reg)


# ----------------------------------------------------- parameter construction

def _bilinear_1d(kernel=UP_K):
    # same formula as fill_up_weights (separable: w[i, j] = f[i] * f[j])
    f = math.ceil(kernel / 2)
    c = (2 * f - 1 - f % 2) / (2.0 * f)
    i = jnp.arange(kernel, dtype=jnp.float32)
    return 1.0 - jnp.abs(i / f - c)


def _up_matrix(out_size, in_size):
    # ConvTranspose (kernel=16, stride=8, pad=4) along one axis as a matrix:
    #   U[o, k] = f1d[o + pad - stride*k] if the index is valid else 0
    f1d = _bilinear_1d()
    o = jnp.arange(out_size)[:, None]
    k = jnp.arange(in_size)[None, :]
    idx = o + UP_P - UP_S * k
    valid = (idx >= 0) & (idx < UP_K)
    return jnp.where(valid, f1d[jnp.clip(idx, 0, UP_K - 1)], 0.0).astype(jnp.float32)


def _patchify(x_nchw):
    # 8x8 / stride-8 patch extraction for the backbone stub; row order (n, h, w),
    # column order (patch_row, patch_col, cin).
    N, Cin, H, W = x_nchw.shape
    Hs, Ws = H // 8, W // 8
    return (x_nchw.reshape(N, Cin, Hs, 8, Ws, 8)
            .transpose(0, 2, 4, 3, 5, 1)
            .reshape(N * Hs * Ws, 8 * 8 * Cin))


def make_params(key):
    k1, k2, k3, k4 = jax.random.split(key, 4)
    params = {}
    # base stub: 8x8/stride-8 patch conv  (TODO(synk): real DRN backbone unavailable)
    params["w_base"] = jax.random.normal(k1, (8 * 8 * C_IN, C_FEAT), jnp.float32) \
        * math.sqrt(2.0 / (8 * 8 * C_IN))
    params["b_base"] = jnp.zeros((1, C_FEAT), jnp.float32)
    # seg 1x1 conv: normal(0, sqrt(2/(1*1*classes))), bias zero (as in DRNSeg)
    params["w_seg"] = jax.random.normal(k2, (C_FEAT, CLASSES), jnp.float32) \
        * math.sqrt(2.0 / CLASSES)
    params["b_seg"] = jnp.zeros((1, CLASSES), jnp.float32)
    # regression head modeled as a 1x1 conv (19 -> 2); nonzero bias so the
    # bias-after-upsample placement is exercised by the test.
    params["w_reg"] = jax.random.normal(k3, (CLASSES, REG_OUT), jnp.float32) \
        * math.sqrt(2.0 / CLASSES)
    params["b_reg"] = 0.2 * jax.random.normal(k4, (1, REG_OUT), jnp.float32)
    return params


# ------------------------------------------------------------------- forward

def drn_instance_forward(x_nchw, params):
    """x_nchw: (N, 3, H, W) float32, H and W divisible by 8.
    Returns (N, 21, H, W) = cat(logsoftmax(up(seg(base(x)))), reg_head(up(seg(base(x)))))."""
    N, Cin, H, W = x_nchw.shape
    assert Cin == C_IN and H % 8 == 0 and W % 8 == 0
    Hs, Ws = H // 8, W // 8
    bf = jnp.bfloat16

    # backbone-stub patchify, done once in bf16 (halves the wrapper round trip).
    # TODO(synk): with a real DRN backbone this is replaced by backbone kernels.
    xp = _patchify(x_nchw).astype(bf)

    # Fold the regression head to low resolution: the depthwise bilinear upsample is
    # identical on every channel, so it commutes with the 1x1 channel mix; the reg
    # BIAS is added after upsampling (bilinear border rows don't sum to 1).
    w_comb = jnp.concatenate([params["w_seg"], params["w_seg"] @ params["w_reg"]], axis=1)
    b_comb = jnp.concatenate([params["b_seg"], params["b_seg"] @ params["w_reg"]], axis=1)

    seg = _base_seg(xp, params["w_base"].astype(bf), params["b_base"],
                    w_comb.astype(bf), b_comb)                         # (M, 21) bf16

    # channel-major low-res layout (tiny tensor) feeding the batched upsample matmuls
    seg_lo = seg.reshape(N, Hs, Ws, C_ALL).transpose(0, 3, 1, 2)        # (N, 21, Hs, Ws)

    # separable bilinear upsample factors (bf16 MXU operands, f32 accumulation)
    uh = _up_matrix(H, Hs).astype(bf)                                   # (H, Hs)
    uwT = _up_matrix(W, Ws).T.astype(bf)                                # (Ws, W)

    # fused upsample + log-softmax + reg bias + concat, written directly as NCHW
    return _upsample_head(seg_lo, uh, uwT, params["b_reg"])


# ----------------------------------------------------------- pure-jnp reference

def _reference_forward(x_nchw, params):
    # Module-faithful order (upsample 19ch -> logsoftmax; reg head on up(seg) at full
    # res).  Matmul operands are cast to bf16 where the kernels cast, so the
    # comparison isolates structural/indexing errors rather than dtype choice.
    N, Cin, H, W = x_nchw.shape
    Hs, Ws = H // 8, W // 8
    bf = jnp.bfloat16
    xp = _patchify(x_nchw).astype(bf)
    feat = jnp.maximum(
        jnp.dot(xp, params["w_base"].astype(bf),
                preferred_element_type=jnp.float32) + params["b_base"], 0.0)
    s = jnp.dot(feat.astype(bf), params["w_seg"].astype(bf),
                preferred_element_type=jnp.float32) + params["b_seg"]
    s = s.reshape(N, Hs, Ws, CLASSES)
    uh = _up_matrix(H, Hs).astype(bf).astype(jnp.float32)
    uw = _up_matrix(W, Ws).astype(bf).astype(jnp.float32)
    y = jnp.einsum("hi,wj,nijc->nhwc", uh, uw, s.astype(bf).astype(jnp.float32))
    logsm = jax.nn.log_softmax(y, axis=-1)
    reg = y @ params["w_reg"] + params["b_reg"]
    return jnp.concatenate([logsm, reg], axis=-1).transpose(0, 3, 1, 2)


if __name__ == "__main__":
    key = jax.random.PRNGKey(0)
    kx, kp = jax.random.split(key)
    x = jax.random.normal(kx, (2, C_IN, 16, 16), jnp.float32)
    params = make_params(kp)

    fwd = jax.jit(drn_instance_forward)
    out = jax.block_until_ready(fwd(x, params))

    assert out.shape == (2, C_ALL, 16, 16), out.shape
    assert out.dtype == jnp.float32
    assert bool(jnp.all(jnp.isfinite(out)))

    # channels 0..18 are a log-softmax over channels -> exp sums to 1 (kernel-internal
    # consistency, independent of bf16 operand rounding).
    probs = jnp.exp(out[:, :CLASSES]).sum(axis=1)
    assert bool(jnp.allclose(probs, 1.0, atol=1e-3))

    # compare against the pure-jnp reference (tolerance covers bf16 MXU operands /
    # the bf16 carried scratch / the folded-vs-unfolded reg-head rounding order).
    ref = _reference_forward(x, params)
    assert bool(jnp.allclose(out, ref, atol=1e-1, rtol=1e-1)), \
        float(jnp.max(jnp.abs(out - ref)))

    print("KERNEL_OK")
</pallas_src>

<mosaic_0001>
module attributes {stable_mosaic.version = 11 : i64} {
  func.func @_base_seg_kernel(%arg0: i32, %arg1: memref<8x192xbf16, #tpu.memory_space<vmem>>, %arg2: memref<192x32xbf16, #tpu.memory_space<vmem>>, %arg3: memref<1x32xf32, #tpu.memory_space<vmem>>, %arg4: memref<32x21xbf16, #tpu.memory_space<vmem>>, %arg5: memref<1x21xf32, #tpu.memory_space<vmem>>, %arg6: memref<8x21xbf16, #tpu.memory_space<vmem>>) attributes {dimension_semantics = [#tpu.dimension_semantics<parallel>], iteration_bounds = array<i64: 1>, scalar_prefetch = 0 : i64, scratch_operands = 0 : i64, tpu.core_type = #tpu.core_type<tc>, window_params = [{transform_indices = @transform_0, window_bounds = array<i64: 8, 192>}, {pipeline_mode = #tpu.pipeline_mode<synchronous>, transform_indices = @transform_1, window_bounds = array<i64: 192, 32>}, {pipeline_mode = #tpu.pipeline_mode<synchronous>, transform_indices = @transform_2, window_bounds = array<i64: 1, 32>}, {pipeline_mode = #tpu.pipeline_mode<synchronous>, transform_indices = @transform_3, window_bounds = array<i64: 32, 21>}, {pipeline_mode = #tpu.pipeline_mode<synchronous>, transform_indices = @transform_4, window_bounds = array<i64: 1, 21>}, {transform_indices = @transform_5, window_bounds = array<i64: 8, 21>}]} {
    %c0 = arith.constant 0 : index
    %c0_0 = arith.constant 0 : index
    %0 = vector.load %arg1[%c0, %c0_0] : memref<8x192xbf16, #tpu.memory_space<vmem>>, vector<8x192xbf16>
    %c0_1 = arith.constant 0 : index
    %c0_2 = arith.constant 0 : index
    %1 = vector.load %arg2[%c0_1, %c0_2] : memref<192x32xbf16, #tpu.memory_space<vmem>>, vector<192x32xbf16>
    %cst = arith.constant dense<0.000000e+00> : vector<8x32xf32>
    %2 = tpu.matmul %0, %1, %cst {dimension_numbers = #tpu.dot_dimension_numbers<[1], [0], [0], [1], [0, 0, 1, 1], [], []>} : vector<8x192xbf16>, vector<192x32xbf16>, vector<8x32xf32> -> vector<8x32xf32>
    %c0_3 = arith.constant 0 : index
    %c0_4 = arith.constant 0 : index
    %3 = vector.load %arg3[%c0_3, %c0_4] : memref<1x32xf32, #tpu.memory_space<vmem>>, vector<1x32xf32>
    %4 = vector.broadcast %3 : vector<1x32xf32> to vector<8x32xf32>
    %5 = arith.addf %2, %4 : vector<8x32xf32>
    %cst_5 = arith.constant 0.000000e+00 : f32
    %6 = vector.broadcast %cst_5 : f32 to vector<8x32xf32>
    %7 = arith.maximumf %5, %6 : vector<8x32xf32>
    %8 = arith.truncf %7 : vector<8x32xf32> to vector<8x32xbf16>
    %c0_6 = arith.constant 0 : index
    %c0_7 = arith.constant 0 : index
    %9 = vector.load %arg4[%c0_6, %c0_7] : memref<32x21xbf16, #tpu.memory_space<vmem>>, vector<32x21xbf16>
    %cst_8 = arith.constant dense<0.000000e+00> : vector<8x21xf32>
    %10 = tpu.matmul %8, %9, %cst_8 {dimension_numbers = #tpu.dot_dimension_numbers<[1], [0], [0], [1], [0, 0, 1, 1], [], []>} : vector<8x32xbf16>, vector<32x21xbf16>, vector<8x21xf32> -> vector<8x21xf32>
    %c0_9 = arith.constant 0 : index
    %c0_10 = arith.constant 0 : index
    %11 = vector.load %arg5[%c0_9, %c0_10] : memref<1x21xf32, #tpu.memory_space<vmem>>, vector<1x21xf32>
    %12 = vector.broadcast %11 : vector<1x21xf32> to vector<8x21xf32>
    %13 = arith.addf %10, %12 : vector<8x21xf32>
    %14 = arith.truncf %13 : vector<8x21xf32> to vector<8x21xbf16>
    %c0_11 = arith.constant 0 : index
    %c0_12 = arith.constant 0 : index
    %15 = vector.load %arg6[%c0_11, %c0_12] : memref<8x21xbf16, #tpu.memory_space<vmem>>, vector<8x21xbf16>
    tpu.vector_store %arg6[%c0_11, %c0_12], %14 {strides = array<i32>} : memref<8x21xbf16, #tpu.memory_space<vmem>>, vector<8x21xbf16>,
    return
  }
  func.func @transform_0(%arg0: i32) -> (i32, i32) {
    %c0_i32 = arith.constant 0 : i32
    %c0_i32_0 = arith.constant 0 : i32
    return %arg0, %c0_i32 : i32, i32
  }
  func.func @transform_1(%arg0: i32) -> (i32, i32) {
    %c0_i32 = arith.constant 0 : i32
    %c0_i32_0 = arith.constant 0 : i32
    %c0_i32_1 = arith.constant 0 : i32
    return %c0_i32, %c0_i32_0 : i32, i32
  }
  func.func @transform_2(%arg0: i32) -> (i32, i32) {
    %c0_i32 = arith.constant 0 : i32
    %c0_i32_0 = arith.constant 0 : i32
    %c0_i32_1 = arith.constant 0 : i32
    return %c0_i32, %c0_i32_0 : i32, i32
  }
  func.func @transform_3(%arg0: i32) -> (i32, i32) {
    %c0_i32 = arith.constant 0 : i32
    %c0_i32_0 = arith.constant 0 : i32
    %c0_i32_1 = arith.constant 0 : i32
    return %c0_i32, %c0_i32_0 : i32, i32
  }
  func.func @transform_4(%arg0: i32) -> (i32, i32) {
    %c0_i32 = arith.constant 0 : i32
    %c0_i32_0 = arith.constant 0 : i32
    %c0_i32_1 = arith.constant 0 : i32
    return %c0_i32, %c0_i32_0 : i32, i32
  }
  func.func @transform_5(%arg0: i32) -> (i32, i32) {
    %c0_i32 = arith.constant 0 : i32
    %c0_i32_0 = arith.constant 0 : i32
    return %arg0, %c0_i32 : i32, i32
  }
}

module attributes {stable_mosaic.version = 11 : i64} {
  func.func @_up_head_kernel(%arg0: i32, %arg1: i32, %arg2: i32, %arg3: memref<1x21x2x2xbf16, #tpu.memory_space<vmem>>, %arg4: memref<16x2xbf16, #tpu.memory_space<vmem>>, %arg5: memref<2x16xbf16, #tpu.memory_space<vmem>>, %arg6: memref<1x2xf32, #tpu.memory_space<smem>>, %arg7: memref<1x21x16x16xf32, #tpu.memory_space<vmem>>, %arg8: memref<21x16x2xbf16, #tpu.memory_space<vmem>>) attributes {dimension_semantics = [#tpu.dimension_semantics<parallel>, #tpu.dimension_semantics<parallel>, #tpu.dimension_semantics<arbitrary>], iteration_bounds = array<i64: 2, 1, 1>, scalar_prefetch = 0 : i64, scratch_operands = 1 : i64, tpu.core_type = #tpu.core_type<tc>, window_params = [{transform_indices = @transform_0, window_bounds = array<i64: 1, 21, 2, 2>}, {transform_indices = @transform_1, window_bounds = array<i64: 16, 2>}, {transform_indices = @transform_2, window_bounds = array<i64: 2, 16>}, {transform_indices = @transform_3, window_bounds = array<i64: 1, 2>}, {transform_indices = @transform_4, window_bounds = array<i64: 1, 21, 16, 16>}]} {
    %c0_i32 = arith.constant 0 : i32
    %0 = arith.cmpi eq, %arg2, %c0_i32 : i32
    %1 = arith.extui %0 : i1 to i32
    %c0_i32_0 = arith.constant 0 : i32
    %2 = arith.cmpi ne, %1, %c0_i32_0 : i32
    scf.if %2 {
      %c0_20 = arith.constant 0 : index
      %c0_21 = arith.constant 0 : index
      %39 = vector.load %arg4[%c0_20, %c0_21] : memref<16x2xbf16, #tpu.memory_space<vmem>>, vector<16x2xbf16>
      %40 = vector.shape_cast %39 : vector<16x2xbf16> to vector<1x16x2xbf16>
      %41 = vector.broadcast %40 : vector<1x16x2xbf16> to vector<21x16x2xbf16>
      %c0_22 = arith.constant 0 : index
      %c0_23 = arith.constant 0 : index
      %c0_24 = arith.constant 0 : index
      %c0_25 = arith.constant 0 : index
      %42 = vector.load %arg3[%c0_22, %c0_23, %c0_24, %c0_25] : memref<1x21x2x2xbf16, #tpu.memory_space<vmem>>, vector<1x21x2x2xbf16>
      %43 = vector.shape_cast %42 : vector<1x21x2x2xbf16> to vector<21x2x2xbf16>
      "tpu.trace_start"() <{level = 10 : i32, message = "cth,chw->ctw"}> : () -> ()
      %cst_26 = arith.constant dense<0.000000e+00> : vector<21x16x2xf32>
      %44 = tpu.matmul %41, %43, %cst_26 {dimension_numbers = #tpu.dot_dimension_numbers<[2], [1], [1], [2], [0, 0, 0, 1, 1, 2], [0], [0]>} : vector<21x16x2xbf16>, vector<21x2x2xbf16>, vector<21x16x2xf32> -> vector<21x16x2xf32>
      "tpu.trace_stop"() : () -> ()
      %45 = arith.truncf %44 : vector<21x16x2xf32> to vector<21x16x2xbf16>
      %c0_27 = arith.constant 0 : index
      %c0_28 = arith.constant 0 : index
      %c0_29 = arith.constant 0 : index
      %46 = vector.load %arg8[%c0_27, %c0_28, %c0_29] : memref<21x16x2xbf16, #tpu.memory_space<vmem>>, vector<21x16x2xbf16>
      tpu.vector_store %arg8[%c0_27, %c0_28, %c0_29], %45 {strides = array<i32>} : memref<21x16x2xbf16, #tpu.memory_space<vmem>>, vector<21x16x2xbf16>,
    } else {
    }
    %c0 = arith.constant 0 : index
    %c0_1 = arith.constant 0 : index
    %c0_2 = arith.constant 0 : index
    %3 = vector.load %arg8[%c0, %c0_1, %c0_2] : memref<21x16x2xbf16, #tpu.memory_space<vmem>>, vector<21x16x2xbf16>
    %4 = vector.shape_cast %3 : vector<21x16x2xbf16> to vector<336x2xbf16>
    %c0_3 = arith.constant 0 : index
    %c0_4 = arith.constant 0 : index
    %5 = vector.load %arg5[%c0_3, %c0_4] : memref<2x16xbf16, #tpu.memory_space<vmem>>, vector<2x16xbf16>
    %cst = arith.constant dense<0.000000e+00> : vector<336x16xf32>
    %6 = tpu.matmul %4, %5, %cst {dimension_numbers = #tpu.dot_dimension_numbers<[1], [0], [0], [1], [0, 0, 1, 1], [], []>} : vector<336x2xbf16>, vector<2x16xbf16>, vector<336x16xf32> -> vector<336x16xf32>
    %7 = vector.shape_cast %6 : vector<336x16xf32> to vector<21x16x16xf32>
    %8 = vector.extract_strided_slice %7 {offsets = [0, 0, 0], sizes = [19, 16, 16], strides = [1, 1, 1]} : vector<21x16x16xf32> to vector<19x16x16xf32>
    %cst_5 = arith.constant dense<0xFF800000> : vector<16x16xf32>
    %9 = vector.multi_reduction <maximumf>, %8, %cst_5 [0] : vector<19x16x16xf32> to vector<16x16xf32>
    %10 = vector.shape_cast %9 : vector<16x16xf32> to vector<1x16x16xf32>
    %11 = vector.broadcast %10 : vector<1x16x16xf32> to vector<19x16x16xf32>
    %12 = arith.subf %8, %11 : vector<19x16x16xf32>
    %13 = math.exp %12 : vector<19x16x16xf32>
    %cst_6 = arith.constant dense<0.000000e+00> : vector<16x16xf32>
    %14 = vector.multi_reduction <add>, %13, %cst_6 [0] : vector<19x16x16xf32> to vector<16x16xf32>
    %15 = vector.shape_cast %14 : vector<16x16xf32> to vector<1x16x16xf32>
    %16 = math.log %15 : vector<1x16x16xf32>
    %17 = arith.addf %10, %16 : vector<1x16x16xf32>
    %18 = vector.broadcast %17 : vector<1x16x16xf32> to vector<19x16x16xf32>
    %19 = arith.subf %8, %18 : vector<19x16x16xf32>
    %c0_7 = arith.constant 0 : index
    %c0_8 = arith.constant 0 : index
    %c0_9 = arith.constant 0 : index
    %c0_10 = arith.constant 0 : index
    %20 = vector.load %arg7[%c0_7, %c0_8, %c0_9, %c0_10] : memref<1x21x16x16xf32, #tpu.memory_space<vmem>>, vector<1x19x16x16xf32>
    %21 = vector.shape_cast %20 : vector<1x19x16x16xf32> to vector<19x16x16xf32>
    %22 = vector.shape_cast %19 : vector<19x16x16xf32> to vector<1x19x16x16xf32>
    tpu.vector_store %arg7[%c0_7, %c0_8, %c0_9, %c0_10], %22 {strides = array<i32>} : memref<1x21x16x16xf32, #tpu.memory_space<vmem>>, vector<1x19x16x16xf32>,
    %23 = vector.extract_strided_slice %7 {offsets = [19, 0, 0], sizes = [1, 16, 16], strides = [1, 1, 1]} : vector<21x16x16xf32> to vector<1x16x16xf32>
    %24 = vector.shape_cast %23 : vector<1x16x16xf32> to vector<16x16xf32>
    %c0_11 = arith.constant 0 : index
    %c0_12 = arith.constant 0 : index
    %25 = memref.load %arg6[%c0_11, %c0_12] : memref<1x2xf32, #tpu.memory_space<smem>>
    %26 = vector.broadcast %25 : f32 to vector<16x16xf32>
    %27 = arith.addf %24, %26 : vector<16x16xf32>
    %c0_13 = arith.constant 0 : index
    %c19 = arith.constant 19 : index
    %c0_14 = arith.constant 0 : index
    %c0_15 = arith.constant 0 : index
    %28 = vector.load %arg7[%c0_13, %c19, %c0_14, %c0_15] : memref<1x21x16x16xf32, #tpu.memory_space<vmem>>, vector<1x1x16x16xf32>
    %29 = vector.shape_cast %28 : vector<1x1x16x16xf32> to vector<16x16xf32>
    %30 = vector.shape_cast %27 : vector<16x16xf32> to vector<1x1x16x16xf32>
    tpu.vector_store %arg7[%c0_13, %c19, %c0_14, %c0_15], %30 {strides = array<i32>} : memref<1x21x16x16xf32, #tpu.memory_space<vmem>>, vector<1x1x16x16xf32>,
    %31 = vector.extract_strided_slice %7 {offsets = [20, 0, 0], sizes = [1, 16, 16], strides = [1, 1, 1]} : vector<21x16x16xf32> to vector<1x16x16xf32>
    %32 = vector.shape_cast %31 : vector<1x16x16xf32> to vector<16x16xf32>
    %c0_16 = arith.constant 0 : index
    %c1 = arith.constant 1 : index
    %33 = memref.load %arg6[%c0_16, %c1] : memref<1x2xf32, #tpu.memory_space<smem>>
    %34 = vector.broadcast %33 : f32 to vector<16x16xf32>
    %35 = arith.addf %32, %34 : vector<16x16xf32>
    %c0_17 = arith.constant 0 : index
    %c20 = arith.constant 20 : index
    %c0_18 = arith.constant 0 : index
    %c0_19 = arith.constant 0 : index
    %36 = vector.load %arg7[%c0_17, %c20, %c0_18, %c0_19] : memref<1x21x16x16xf32, #tpu.memory_space<vmem>>, vector<1x1x16x16xf32>
    %37 = vector.shape_cast %36 : vector<1x1x16x16xf32> to vector<16x16xf32>
    %38 = vector.shape_cast %35 : vector<16x16xf32> to vector<1x1x16x16xf32>
    tpu.vector_store %arg7[%c0_17, %c20, %c0_18, %c0_19], %38 {strides = array<i32>} : memref<1x21x16x16xf32, #tpu.memory_space<vmem>>, vector<1x1x16x16xf32>,
    return
  }
  func.func @transform_0(%arg0: i32, %arg1: i32, %arg2: i32) -> (i32, i32, i32, i32) {
    %c0_i32 = arith.constant 0 : i32
    %c0_i32_0 = arith.constant 0 : i32
    %c0_i32_1 = arith.constant 0 : i32
    %c0_i32_2 = arith.constant 0 : i32
    return %arg0, %c0_i32, %c0_i32_0, %c0_i32_1 : i32, i32, i32, i32
  }
  func.func @transform_1(%arg0: i32, %arg1: i32, %arg2: i32) -> (i32, i32) {
    %c0_i32 = arith.constant 0 : i32
    %c0_i32_0 = arith.constant 0 : i32
    return %arg1, %c0_i32 : i32, i32
  }
  func.func @transform_2(%arg0: i32, %arg1: i32, %arg2: i32) -> (i32, i32) {
    %c0_i32 = arith.constant 0 : i32
    %c0_i32_0 = arith.constant 0 : i32
    return %c0_i32, %arg2 : i32, i32
  }
  func.func @transform_3(%arg0: i32, %arg1: i32, %arg2: i32) -> (i32, i32) {
    %c0_i32 = arith.constant 0 : i32
    %c0_i32_0 = arith.constant 0 : i32
    %c0_i32_1 = arith.constant 0 : i32
    return %c0_i32, %c0_i32_0 : i32, i32
  }
  func.func @transform_4(%arg0: i32, %arg1: i32, %arg2: i32) -> (i32, i32, i32, i32) {
    %c0_i32 = arith.constant 0 : i32
    %c0_i32_0 = arith.constant 0 : i32
    return %arg0, %c0_i32, %arg1, %arg2 : i32, i32, i32, i32
  }
}

</mosaic_0001>

<llo_original>
// kernel: drn_instance_forward.2
$region0: #{drn_instance_forward.2}
  #allocation0 [shape = 'u32[]', space=smem, size = 0x4, offset = 0x4, fixed_abs, tag = 'smem constant byte address 0x4 - core index']
  #allocation1 [shape = 'u32[144,128]{1,0:T(1,128)}', space=vmem, size = 0x12000, scoped, tag = 'internal scratch']
  %s0 = inlined_call_operand.vmem [shape: bf16[8,192], index: 0, kind: input, shape index: {}]
  %s1 = inlined_call_operand.vmem [shape: bf16[192,32], index: 1, kind: input, shape index: {}]
  %s2 = inlined_call_operand.vmem [shape: f32[1,32], index: 2, kind: input, shape index: {}]
  %s3 = inlined_call_operand.vmem [shape: bf16[32,21], index: 3, kind: input, shape index: {}]
  %s4 = inlined_call_operand.vmem [shape: f32[1,21], index: 4, kind: input, shape index: {}]
  %s5 = inlined_call_operand.vmem [shape: bf16[8,21], index: 5, kind: output, shape index: {}]
  %s6 = sld [smem:[#allocation0]]
  $region30: #{drn_instance_forward.2} parent=0
    _
  %s8 = ssub.s32 1, %s6
  %s9 = scalar_select 0, %s8, %s6
  // Predicated region
  $region2: #{drn_instance_forward.2} parent=0 // pred_check
    _
  $region3: #{drn_instance_forward.2} parent=0 // pred_check_branch
    %11 = sbr.rel (0) target = $region5
  $region4: #{drn_instance_forward.2} parent=0 // pred_region
    _
  $region5: #{drn_instance_forward.2} parent=0 // pred_fallthru
    _
  // Predicated region
  $region6: #{drn_instance_forward.2} parent=0 // pred_check
    _
  $region7: #{drn_instance_forward.2} parent=0 // pred_check_branch
    %13 = sbr.rel (0) target = $region9
  $region8: #{drn_instance_forward.2} parent=0 // pred_region
    _
  $region9: #{drn_instance_forward.2} parent=0 // pred_fallthru
    _
  // Predicated region
  $region10: #{drn_instance_forward.2} parent=0 // pred_check
    _
  $region11: #{drn_instance_forward.2} parent=0 // pred_check_branch
    %15 = sbr.rel (0) target = $region13
  $region12: #{drn_instance_forward.2} parent=0 // pred_region
    _
  $region13: #{drn_instance_forward.2} parent=0 // pred_fallthru
    _
  // Predicated region
  $region14: #{drn_instance_forward.2} parent=0 // pred_check
    _
  $region15: #{drn_instance_forward.2} parent=0 // pred_check_branch
    %17 = sbr.rel (0) target = $region17
  $region16: #{drn_instance_forward.2} parent=0 // pred_region
    _
  $region17: #{drn_instance_forward.2} parent=0 // pred_fallthru
    _
  // Predicated region
  $region18: #{drn_instance_forward.2} parent=0 // pred_check
    _
  $region19: #{drn_instance_forward.2} parent=0 // pred_check_branch
    %19 = sbr.rel (0) target = $region21
  $region20: #{drn_instance_forward.2} parent=0 // pred_region
    _
  $region21: #{drn_instance_forward.2} parent=0 // pred_fallthru
    _
  %v21 = vld [vmem:[%s0] sm:$0xff]
  %v22 = vld [vmem:[%s1] sm:$0xf]
  %v23 = vld [vmem:[%s1 + $0x4] sm:$0xf]
  %v24 = vld [vmem:[%s1 + $0x8] sm:$0xf]
  %v25 = vld [vmem:[%s1 + $0xc] sm:$0xf]
  %v26 = vld [vmem:[%s1 + $0x10] sm:$0xf]
  %v27 = vld [vmem:[%s1 + $0x14] sm:$0xf]
  %v28 = vld [vmem:[%s1 + $0x18] sm:$0xf]
  %v29 = vld [vmem:[%s1 + $0x1c] sm:$0xf]
  %v30 = vld [vmem:[%s1 + $0x20] sm:$0xf]
  %v31 = vld [vmem:[%s1 + $0x24] sm:$0xf]
  %v32 = vld [vmem:[%s1 + $0x28] sm:$0xf]
  %v33 = vld [vmem:[%s1 + $0x2c] sm:$0xf]
  %v34 = vld [vmem:[%s1 + $0x30] sm:$0xf]
  %v35 = vld [vmem:[%s1 + $0x34] sm:$0xf]
  %v36 = vld [vmem:[%s1 + $0x38] sm:$0xf]
  %v37 = vld [vmem:[%s1 + $0x3c] sm:$0xf]
  %v38 = vld [vmem:[%s1 + $0x40] sm:$0xf]
  %v39 = vld [vmem:[%s1 + $0x44] sm:$0xf]
  %v40 = vld [vmem:[%s1 + $0x48] sm:$0xf]
  %v41 = vld [vmem:[%s1 + $0x4c] sm:$0xf]
  %v42 = vld [vmem:[%s1 + $0x50] sm:$0xf]
  %v43 = vld [vmem:[%s1 + $0x54] sm:$0xf]
  %v44 = vld [vmem:[%s1 + $0x58] sm:$0xf]
  %v45 = vld [vmem:[%s1 + $0x5c] sm:$0xf]
  %v46 = vld [vmem:[%s2] sm:$0x1]
  %v48 = vlaneseq
  %v49 = vshrl.u32 %v48, 7
  %v50 = vsub.s32 0, %v49
  %v51 = vrot.slane %v46, %v50
  %v54 = vunpack.c.l.b16 %v21
  %v55 = vunpack.c.h.b16 %v21
  %v56 = vpack.c.b16 %v54, %v54
  %v57 = vpack.c.b16 %v55, %v55
  %v83 = vunpack.c.l.b16 %v22
  %v84 = vunpack.c.l.b16 %v23
  %v85 = vunpack.c.l.b16 %v24
  %v86 = vunpack.c.l.b16 %v25
  %v87 = vunpack.c.l.b16 %v26
  %v88 = vunpack.c.l.b16 %v27
  %v89 = vunpack.c.l.b16 %v28
  %v90 = vunpack.c.l.b16 %v29
  %v91 = vunpack.c.l.b16 %v30
  %v92 = vunpack.c.l.b16 %v31
  %v93 = vunpack.c.l.b16 %v32
  %v94 = vunpack.c.l.b16 %v33
  %v95 = vunpack.c.l.b16 %v34
  %v96 = vunpack.c.l.b16 %v35
  %v97 = vunpack.c.l.b16 %v36
  %v98 = vunpack.c.l.b16 %v37
  %v99 = vunpack.c.l.b16 %v38
  %v100 = vunpack.c.l.b16 %v39
  %v101 = vunpack.c.l.b16 %v40
  %v102 = vunpack.c.l.b16 %v41
  %v103 = vunpack.c.l.b16 %v42
  %v104 = vunpack.c.l.b16 %v43
  %v105 = vunpack.c.l.b16 %v44
  %v106 = vunpack.c.l.b16 %v45
  %v107 = vpack.c.b16 %v84, %v83
  %v108 = vpack.c.b16 %v86, %v85
  %v109 = vpack.c.b16 %v88, %v87
  %v110 = vpack.c.b16 %v90, %v89
  %v111 = vpack.c.b16 %v92, %v91
  %v112 = vpack.c.b16 %v94, %v93
  %v113 = vpack.c.b16 %v96, %v95
  %v114 = vpack.c.b16 %v98, %v97
  %v115 = vpack.c.b16 %v100, %v99
  %v116 = vpack.c.b16 %v102, %v101
  %v117 = vpack.c.b16 %v104, %v103
  %v118 = vpack.c.b16 %v106, %v105
  %vm131 = vcmask 523264
  %v133 = vsel %vm131, %v57, 0
  %135 = vmatprep.subr.bf16.mxu0 0
  %136 = vmatpush1.bf16.msra.mxu0 %v107
  %137 = vmatprep.subr.bf16.mxu0 0
  %138 = vmatpush1.bf16.msra.mxu0 %v108
  %139 = vmatprep.subr.bf16.mxu0 0
  %140 = vmatpush1.bf16.msra.mxu0 %v109
  %141 = vmatprep.subr.bf16.mxu0 0
  %142 = vmatpush1.bf16.msra.mxu0 %v110
  %143 = vmatprep.subr.bf16.mxu0 0
  %144 = vmatpush1.bf16.msra.mxu0 %v111
  %145 = vmatprep.subr.bf16.mxu0 0
  %146 = vmatpush1.bf16.msra.mxu0 %v112
  %147 = vmatprep.subr.bf16.mxu0 0
  %148 = vmatpush1.bf16.msra.mxu0 %v113
  %149 = vmatprep.subr.bf16.mxu0 0
  %150 = vmatpush1.bf16.msra.mxu0 %v114
  %151 = vmatprep.subr.bf16.mxu0 0
  %152 = vmatpush1.bf16.msra.mxu0 %v115
  %153 = vmatprep.subr.bf16.mxu0 0
  %154 = vmatpush1.bf16.msra.mxu0 %v116
  %155 = vmatprep.subr.bf16.mxu0 0
  %156 = vmatpush1.bf16.msra.mxu0 %v117
  %157 = vmatprep.subr.bf16.mxu0 0
  %158 = vmatpush1.bf16.msra.mxu0 %v118
  %159 = vmatprep.subr.bf16.mxu0 0
  %160 = vmatpush1.bf16.msra.mxu0 0
  %161 = vmatprep.subr.bf16.mxu0 0
  %162 = vmatpush1.bf16.msra.mxu0 0
  %163 = vmatprep.subr.bf16.mxu0 0
  %164 = vmatpush1.bf16.msra.mxu0 0
  %165 = vmatprep.subr.bf16.mxu0 0
  %166 = vmatpush1.bf16.msra.mxu0 0
  %167 = vmatprep.mubr.bf16.mxu0 %v133
  %168 = vmatmul.mubr.bf16.gmra.mrb[0].mxu0 %v56
  %v169 = vpop.f32.mrb[0].mxu0
  %v170 = vadd.f32 %v51, %v169
  %v171 = vpop.f32.mrb[0].mxu0
  %v172 = vpop.f32.mrb[0].mxu0
  %v173 = vpop.f32.mrb[0].mxu0
  %174 = vdwg.mxu0
  %v175 = vmax.f32 %v170, 0.0
  %v176 = vpack.c.bf16 %v175, %v175
  %v177 = vld [vmem:[%s3] sm:$0xf]
  %v178 = vld [vmem:[%s3 + $0x4] sm:$0xf]
  %v179 = vld [vmem:[%s3 + $0x8] sm:$0xf]
  %v180 = vld [vmem:[%s3 + $0xc] sm:$0xf]
  %v181 = vld [vmem:[%s4] sm:$0x1]
  %v183 = vlaneseq
  %v184 = vshrl.u32 %v183, 7
  %v185 = vsub.s32 0, %v184
  %v186 = vrot.slane %v181, %v185
  %v192 = vunpack.c.l.b16 %v177
  %v193 = vunpack.c.l.b16 %v178
  %v194 = vunpack.c.l.b16 %v179
  %v195 = vunpack.c.l.b16 %v180
  %v196 = vpack.c.b16 %v193, %v192
  %v197 = vpack.c.b16 %v195, %v194
  %vm200 = vcmask 261120
  %v202 = vsel %vm200, %v176, 0
  %204 = vmatprep.subr.bf16.mxu0 0
  %205 = vmatpush1.bf16.msra.mxu0 %v196
  %206 = vmatprep.subr.bf16.mxu0 0
  %207 = vmatpush1.bf16.msra.mxu0 %v197
  %208 = vmatprep.subr.bf16.mxu0 0
  %209 = vmatpush1.bf16.msra.mxu0 0
  %210 = vmatprep.subr.bf16.mxu0 0
  %211 = vmatpush1.bf16.msra.mxu0 0
  %212 = vmatprep.subr.bf16.mxu0 0
  %213 = vmatpush1.bf16.msra.mxu0 0
  %214 = vmatprep.subr.bf16.mxu0 0
  %215 = vmatpush1.bf16.msra.mxu0 0
  %216 = vmatprep.subr.bf16.mxu0 0
  %217 = vmatpush1.bf16.msra.mxu0 0
  %218 = vmatprep.subr.bf16.mxu0 0
  %219 = vmatpush1.bf16.msra.mxu0 0
  %220 = vmatprep.subr.bf16.mxu0 0
  %221 = vmatpush1.bf16.msra.mxu0 0
  %222 = vmatprep.subr.bf16.mxu0 0
  %223 = vmatpush1.bf16.msra.mxu0 0
  %224 = vmatprep.subr.bf16.mxu0 0
  %225 = vmatpush1.bf16.msra.mxu0 0
  %226 = vmatprep.subr.bf16.mxu0 0
  %227 = vmatpush1.bf16.msra.mxu0 0
  %228 = vmatprep.subr.bf16.mxu0 0
  %229 = vmatpush1.bf16.msra.mxu0 0
  %230 = vmatprep.subr.bf16.mxu0 0
  %231 = vmatpush1.bf16.msra.mxu0 0
  %232 = vmatprep.subr.bf16.mxu0 0
  %233 = vmatpush1.bf16.msra.mxu0 0
  %234 = vmatprep.subr.bf16.mxu0 0
  %235 = vmatpush1.bf16.msra.mxu0 0
  %236 = vmatprep.mubr.bf16.mxu0 0
  %237 = vmatmul.mubr.bf16.gmra.mrb[0].mxu0 %v202
  %v238 = vpop.f32.mrb[0].mxu0
  %v239 = vadd.f32 %v186, %v238
  %v240 = vpop.f32.mrb[0].mxu0
  %v241 = vpop.f32.mrb[0].mxu0
  %v242 = vpop.f32.mrb[0].mxu0
  %243 = vdwg.mxu0
  %v244 = vpack.c.bf16 %v239, %v239
  %vm245 = vcmask 166912
  %246 = vst.msk [vmem:[%s5] sm:$0xf] %vm245, %v244
  // Predicated region
  $region22: #{drn_instance_forward.2} parent=0 // pred_check
    _
  $region23: #{drn_instance_forward.2} parent=0 // pred_check_branch
    %248 = sbr.rel (0) target = $region25
  $region24: #{drn_instance_forward.2} parent=0 // pred_region
    _
  $region25: #{drn_instance_forward.2} parent=0 // pred_fallthru
    _
  // Predicated region
  $region26: #{drn_instance_forward.2} parent=0 // pred_check
    _
  $region27: #{drn_instance_forward.2} parent=0 // pred_check_branch
    %250 = sbr.rel (0) target = $region29
  $region28: #{drn_instance_forward.2} parent=0 // pred_region
    _
  $region29: #{drn_instance_forward.2} parent=0 // pred_fallthru
    _

// kernel: drn_instance_forward.3
$region0: #{drn_instance_forward.3}
  #allocation0 [shape = 'u32[]', space=smem, size = 0x4, offset = 0x4, fixed_abs, tag = 'smem constant byte address 0x4 - core index']
  #allocation1 [shape = 'u32[144,128]{1,0:T(1,128)}', space=vmem, size = 0x12000, scoped, tag = 'internal scratch']
  #allocation2 [shape = 'bf16[21,16,2]{2,1,0:T(16,128)(2,1)}', space=vmem, size = 0x15000, scoped, tag = 'scratch operand']
  %s0 = inlined_call_operand.vmem [shape: bf16[2,21,2,2], index: 0, kind: input, shape index: {}]
  %s1 = inlined_call_operand.vmem [shape: bf16[16,2], index: 1, kind: input, shape index: {}]
  %s2 = inlined_call_operand.vmem [shape: bf16[2,16], index: 2, kind: input, shape index: {}]
  %s3 = inlined_call_operand.vmem [shape: f32[1,2], index: 3, kind: input, shape index: {}]
  %s4 = inlined_call_operand.vmem [shape: f32[2,21,16,16], index: 4, kind: output, shape index: {}]
  %s5 = sld [smem:[#allocation0]]
  $region57: #{drn_instance_forward.3} parent=0
    _
  %s7 = ssub.s32 1, %s5
  %s8 = scalar_select 0, %s7, %s5
  $region1: #{drn_instance_forward.3} parent=0
    #allocation3 [shape = 'u8[512]{0}', space=smem, size = 0x200, scoped, tag = 'input window, operand 3, single buffered']
    #allocation4 [shape = 's32[2]{0}', space=sflag, size = 0x8, scoped, tag = 'scoped memory for drn_instance_forward.3']
    %9 = vsyncpa [#allocation4], 0
    loop: start=0, step=1, limit=4
    $region2: #{drn_instance_forward.3} parent=1 // loop_pre_header
      _
    $region3: #{drn_instance_forward.3} parent=1 // loop_header
      %s11 = sphi 0, %s15
      %p12 = scmp.ge.s32.totalorder %s11, 4
      %s18 = sphi 0, %s37
      %s19 = sphi 0, %s33
      %s20 = sphi 0, %s29
      %s21 = sphi 0, %s18
      %s22 = sphi 0, %s19
      %s23 = sphi 0, %s20
      %s24 = sphi 0, %s21
      %s25 = sphi 0, %s22
      %s26 = sphi 0, %s23
      %s40 = sphi 0, %s42
      %s43 = sphi 0, %s40
      %s44 = sphi 0, %s43
      %s60 = sphi 0, %s44
      %s66 = sphi 0, %s68
      %s69 = sphi 0, %s66
      %s70 = sphi 0, %s69
      %s86 = sphi 0, %s70
      %s92 = sphi 0, %s94
      %s95 = sphi 0, %s92
      %s96 = sphi 0, %s95
      %s112 = sphi 0, %s96
      %s116 = sphi 0, %s116
      %s118 = sphi 0, %s116
      %s119 = sphi 0, %s118
      %s133 = sphi 0, %s119
      %s143 = sphi 0, %s145
      %s146 = sphi 0, %s143
      %s147 = sphi 0, %s146
      %s163 = sphi 0, %s147
    $region4: #{drn_instance_forward.3} parent=1 // loop_header_branch
      %14 = sbr.rel (%p12) target = $region8
    $region5: #{drn_instance_forward.3} parent=1 // loop_body
      %s16 = ssub.s32 %s11, 1
      %s17 = ssub.s32 %s11, 2
      %s27 = sadd.s32 1, %s20
      %p28 = scmp.ge.s32.totalorder %s27, 1
      %s29 = scalar_select %p28, 0, %s27
      %s30 = sadd.s32 1, %s19
      %s31 = scalar_select %p28, %s30, %s19
      %p32 = scmp.ge.s32.totalorder %s31, 1
      %s33 = scalar_select %p32, 0, %s31
      %s34 = sadd.s32 1, %s18
      %s35 = scalar_select %p32, %s34, %s18
      %p36 = scmp.ge.s32.totalorder %s35, 2
      %s37 = scalar_select %p36, 0, %s35
      %s38 = ssub.s32 %s18, %s37
      %p39 = scmp.eq.s32.totalorder %s38, 0
      %s41 = sadd.s32 %s40, 1
      %s42 = scalar_select %p39, %s40, %s41
      %p45 = pneg %p39
      %p46 = scmp.eq.s32.totalorder %s11, 1
      %p47 = por %p45, %p46
      %p48 = scmp.ne.s32.totalorder %s40, %s43
      %p49 = scmp.eq.s32.totalorder %s11, 0
      %p50 = por %p48, %p49
      %p51 = scmp.ne.s32.totalorder %s40, %s43
      %p52 = scmp.eq.s32.totalorder %s16, 1
      %p53 = por %p51, %p52
      %p54 = scmp.ne.s32.totalorder %s43, %s44
      %p55 = scmp.eq.s32.totalorder %s16, 0
      %p56 = por %p54, %p55
      %p57 = scmp.ne.s32.totalorder %s43, %s44
      %p58 = scmp.eq.s32.totalorder %s17, 1
      %p59 = por %p57, %p58
      %p61 = scmp.ne.s32.totalorder %s44, %s60
      %p62 = scmp.eq.s32.totalorder %s17, 0
      %p63 = por %p61, %p62
      %s64 = ssub.s32 %s19, %s33
      %p65 = scmp.eq.s32.totalorder %s64, 0
      %s67 = sadd.s32 %s66, 1
      %s68 = scalar_select %p65, %s66, %s67
      %p71 = pneg %p65
      %p72 = scmp.eq.s32.totalorder %s11, 1
      %p73 = por %p71, %p72
      %p74 = scmp.ne.s32.totalorder %s66, %s69
      %p75 = scmp.eq.s32.totalorder %s11, 0
      %p76 = por %p74, %p75
      %p77 = scmp.ne.s32.totalorder %s66, %s69
      %p78 = scmp.eq.s32.totalorder %s16, 1
      %p79 = por %p77, %p78
      %p80 = scmp.ne.s32.totalorder %s69, %s70
      %p81 = scmp.eq.s32.totalorder %s16, 0
      %p82 = por %p80, %p81
      %p83 = scmp.ne.s32.totalorder %s69, %s70
      %p84 = scmp.eq.s32.totalorder %s17, 1
      %p85 = por %p83, %p84
      %p87 = scmp.ne.s32.totalorder %s70, %s86
      %p88 = scmp.eq.s32.totalorder %s17, 0
      %p89 = por %p87, %p88
      %s90 = ssub.s32 %s20, %s29
      %p91 = scmp.eq.s32.totalorder %s90, 0
      %s93 = sadd.s32 %s92, 1
      %s94 = scalar_select %p91, %s92, %s93
      %p97 = pneg %p91
      %p98 = scmp.eq.s32.totalorder %s11, 1
      %p99 = por %p97, %p98
      %p100 = scmp.ne.s32.totalorder %s92, %s95
      %p101 = scmp.eq.s32.totalorder %s11, 0
      %p102 = por %p100, %p101
      %p103 = scmp.ne.s32.totalorder %s92, %s95
      %p104 = scmp.eq.s32.totalorder %s16, 1
      %p105 = por %p103, %p104
      %p106 = scmp.ne.s32.totalorder %s95, %s96
      %p107 = scmp.eq.s32.totalorder %s16, 0
      %p108 = por %p106, %p107
      %p109 = scmp.ne.s32.totalorder %s95, %s96
      %p110 = scmp.eq.s32.totalorder %s17, 1
      %p111 = por %p109, %p110
      %p113 = scmp.ne.s32.totalorder %s96, %s112
      %p114 = scmp.eq.s32.totalorder %s17, 0
      %p115 = por %p113, %p114
      %s117 = sadd.s32 %s116, 1
      %p120 = scmp.eq.s32.totalorder %s11, 1
      %p121 = scmp.ne.s32.totalorder %s116, %s118
      %p122 = scmp.eq.s32.totalorder %s11, 0
      %p123 = por %p121, %p122
      %p124 = scmp.ne.s32.totalorder %s116, %s118
      %p125 = scmp.eq.s32.totalorder %s16, 1
      %p126 = por %p124, %p125
      %p127 = scmp.ne.s32.totalorder %s118, %s119
      %p128 = scmp.eq.s32.totalorder %s16, 0
      %p129 = por %p127, %p128
      %p130 = scmp.ne.s32.totalorder %s118, %s119
      %p131 = scmp.eq.s32.totalorder %s17, 1
      %p132 = por %p130, %p131
      %p134 = scmp.ne.s32.totalorder %s119, %s133
      %p135 = scmp.eq.s32.totalorder %s17, 0
      %p136 = por %p134, %p135
      %s137 = ssub.s32 %s18, %s37
      %s138 = ssub.s32 %s19, %s33
      %s139 = sor.u32 %s137, %s138
      %s140 = ssub.s32 %s20, %s29
      %s141 = sor.u32 %s139, %s140
      %p142 = scmp.eq.s32.totalorder %s141, 0
      %s144 = sadd.s32 %s143, 1
      %s145 = scalar_select %p142, %s143, %s144
      %p148 = pneg %p142
      %p149 = scmp.eq.s32.totalorder %s11, 1
      %p150 = por %p148, %p149
      %p151 = scmp.ne.s32.totalorder %s143, %s146
      %p152 = scmp.eq.s32.totalorder %s11, 0
      %p153 = por %p151, %p152
      %p154 = scmp.ne.s32.totalorder %s143, %s146
      %p155 = scmp.eq.s32.totalorder %s16, 1
      %p156 = por %p154, %p155
      %p157 = scmp.ne.s32.totalorder %s146, %s147
      %p158 = scmp.eq.s32.totalorder %s16, 0
      %p159 = por %p157, %p158
      %p160 = scmp.ne.s32.totalorder %s146, %s147
      %p161 = scmp.eq.s32.totalorder %s17, 1
      %p162 = por %p160, %p161
      %p164 = scmp.ne.s32.totalorder %s147, %s163
      %p165 = scmp.eq.s32.totalorder %s17, 0
      %p166 = por %p164, %p165
      %p167 = scmp.le.s32.totalorder 1, %s11
      %p168 = scmp.lt.s32.totalorder %s11, 3
      %p169 = pnand %p167, %p168
      %p170 = pneg %p169
      // Predicated region
      $region9: #{drn_instance_forward.3} parent=5 // pred_check
        _
      $region10: #{drn_instance_forward.3} parent=5 // pred_check_branch
        %172 = sbr.rel (%p169) target = $region12
      $region11: #{drn_instance_forward.3} parent=5 // pred_region
        %s173 = ssub.s32 %s11, 1
        // Predicated region
        $region13: #{drn_instance_forward.3} parent=11 // pred_check
          %p174 = pneg %p82
        $region14: #{drn_instance_forward.3} parent=11 // pred_check_branch
          %176 = sbr.rel (%p174) target = $region16
        $region15: #{drn_instance_forward.3} parent=11 // pred_region
          %s177 = smul.u32 2, %s22
          %p178 = scmp.lt.s32.totalorder %s177, 1
          %s179 = scalar_select %p178, %s177, 1
          %s180 = smul.addr %s179, 4
          %s181 = scalar_lea.vmem %s1, %s180
          %s182 = smul.u32 2, %s22
        $region16: #{drn_instance_forward.3} parent=11 // pred_fallthru
          _
        // Predicated region
        $region17: #{drn_instance_forward.3} parent=11 // pred_check
          %p183 = pneg %p108
        $region18: #{drn_instance_forward.3} parent=11 // pred_check_branch
          %185 = sbr.rel (%p183) target = $region20
        $region19: #{drn_instance_forward.3} parent=11 // pred_region
          %p186 = scmp.lt.s32.totalorder %s23, 0
          %s187 = scalar_select %p186, %s23, 0
          %s188 = scalar_lea.vmem %s2, %s187
        $region20: #{drn_instance_forward.3} parent=11 // pred_fallthru
          _
        // Predicated region
        $region21: #{drn_instance_forward.3} parent=11 // pred_check
          %p189 = pneg %p129
        $region22: #{drn_instance_forward.3} parent=11 // pred_check_branch
          %191 = sbr.rel (%p189) target = $region24
        $region23: #{drn_instance_forward.3} parent=11 // pred_region
          %s193 = ssub.s32 16, 16
          %194 = vsyncadd [#allocation4], %s193
          %s196 = sshll.u32 %s3, 4
          %s197 = int_to_ptr.vmem [resolvable:$true] %s196
          %199 = dma.vmem_to_smem %s197, 16, [#allocation3], [#allocation4]
        $region24: #{drn_instance_forward.3} parent=11 // pred_fallthru
          _
      $region12: #{drn_instance_forward.3} parent=5 // pred_fallthru
        _
      %p200 = scmp.lt.s32.totalorder %s11, 2
      // Predicated region
      $region25: #{drn_instance_forward.3} parent=5 // pred_check
        %p201 = pneg %p200
      $region26: #{drn_instance_forward.3} parent=5 // pred_check_branch
        %203 = sbr.rel (%p201) target = $region28
      $region27: #{drn_instance_forward.3} parent=5 // pred_region
        // Predicated region
        $region29: #{drn_instance_forward.3} parent=27 // pred_check
          %p204 = pneg %p50
        $region30: #{drn_instance_forward.3} parent=27 // pred_check_branch
          %206 = sbr.rel (%p204) target = $region32
        $region31: #{drn_instance_forward.3} parent=27 // pred_region
          %p207 = scmp.lt.s32.totalorder %s18, 1
          %s208 = scalar_select %p207, %s18, 1
          %s209 = smul.addr %s208, 21
          %s210 = scalar_lea.vmem %s0, %s209
        $region32: #{drn_instance_forward.3} parent=27 // pred_fallthru
          _
      $region28: #{drn_instance_forward.3} parent=5 // pred_fallthru
        _
      %p211 = scmp.le.s32.totalorder 1, %s11
      %p212 = scmp.lt.s32.totalorder %s11, 3
      %p213 = pnand %p211, %p212
      %p214 = pneg %p213
      // Predicated region
      $region33: #{drn_instance_forward.3} parent=5 // pred_check
        _
      $region34: #{drn_instance_forward.3} parent=5 // pred_check_branch
        %216 = sbr.rel (%p213) target = $region36
      $region35: #{drn_instance_forward.3} parent=5 // pred_region
        %s217 = ssub.s32 %s11, 1
        // Predicated region
        $region37: #{drn_instance_forward.3} parent=35 // pred_check
          %p218 = pneg %p129
        $region38: #{drn_instance_forward.3} parent=35 // pred_check_branch
          %220 = sbr.rel (%p218) target = $region40
        $region39: #{drn_instance_forward.3} parent=35 // pred_region
          %221 = dma.done [#allocation4], 16
        $region40: #{drn_instance_forward.3} parent=35 // pred_fallthru
          _
        %222 = sfence
        %p223 = scmp.lt.s32.totalorder %s21, 1
        %s224 = scalar_select %p223, %s21, 1
        %s225 = smul.addr %s224, 21
        %s226 = scalar_lea.vmem %s0, %s225
        %p227 = pneg %p56
        %p228 = pneg %p53
        %s229 = smul.u32 2, %s22
        %p230 = scmp.lt.s32.totalorder %s229, 1
        %s231 = scalar_select %p230, %s229, 1
        %s232 = smul.addr %s231, 4
        %s233 = scalar_lea.vmem %s1, %s232
        %p234 = pneg %p82
        %p235 = pneg %p79
        %p236 = scmp.lt.s32.totalorder %s23, 0
        %s237 = scalar_select %p236, %s23, 0
        %s238 = scalar_lea.vmem %s2, %s237
        %p239 = pneg %p108
        %p240 = pneg %p105
        %p241 = pneg %p129
        %p242 = pneg %p126
        %p243 = pneg %p159
        %p244 = pneg %p156
        %s245 = smul.u32 2, %s22
        %p246 = scmp.lt.s32.totalorder %s21, 1
        %s247 = scalar_select %p246, %s21, 1
        %p248 = scmp.lt.s32.totalorder %s245, 1
        %s249 = scalar_select %p248, %s245, 1
        %p250 = scmp.lt.s32.totalorder %s23, 0
        %s251 = scalar_select %p250, %s23, 0
        %s252 = sadd.s32 %s251, %s249
        %s253 = smul.addr %s247, 42
        %s254 = sadd.s32 %s252, %s253
        %s255 = smul.addr %s254, 8
        %s256 = scalar_lea.vmem %s4, %s255
        %p257 = scmp.lt.s32.totalorder %s21, 1
        %s258 = scalar_select %p257, %s21, 1
        %s259 = smul.addr %s258, 21
        %s260 = scalar_lea.vmem %s0, %s259
        %s261 = smul.u32 2, %s22
        %p262 = scmp.lt.s32.totalorder %s261, 1
        %s263 = scalar_select %p262, %s261, 1
        %s264 = smul.addr %s263, 4
        %s265 = scalar_lea.vmem %s1, %s264
        %s266 = smul.u32 2, %s22
        %p267 = scmp.lt.s32.totalorder %s23, 0
        %s268 = scalar_select %p267, %s23, 0
        %s269 = scalar_lea.vmem %s2, %s268
        %s270 = smul.u32 2, %s22
        %p271 = scmp.lt.s32.totalorder %s21, 1
        %s272 = scalar_select %p271, %s21, 1
        %p273 = scmp.lt.s32.totalorder %s270, 1
        %s274 = scalar_select %p273, %s270, 1
        %p275 = scmp.lt.s32.totalorder %s23, 0
        %s276 = scalar_select %p275, %s23, 0
        %s277 = sadd.s32 %s276, %s274
        %s278 = smul.addr %s272, 42
        %s279 = sadd.s32 %s277, %s278
        %s280 = smul.addr %s279, 8
        %s281 = scalar_lea.vmem %s4, %s280
        %s282 = smul.u32 2, %s22
        %p284 = scmp.eq.s32.totalorder %s23, 0
        // Predicated region
        $region41: #{drn_instance_forward.3} parent=35 // pred_check
          %p285 = pneg %p284
        $region42: #{drn_instance_forward.3} parent=35 // pred_check_branch
          %287 = sbr.rel (%p285) target = $region44
        $region43: #{drn_instance_forward.3} parent=35 // pred_region
          %v288 = vld [vmem:[%s265] sm:$0xf]
          %v289 = vld [vmem:[%s265 + $0x4] sm:$0xf]
          %v290 = vld [vmem:[%s260] sm:$0x1]
          %v291 = vld [vmem:[%s260 + $0x1] sm:$0x1]
          %v292 = vld [vmem:[%s260 + $0x2] sm:$0x1]
          %v293 = vld [vmem:[%s260 + $0x3] sm:$0x1]
          %v294 = vld [vmem:[%s260 + $0x4] sm:$0x1]
          %v295 = vld [vmem:[%s260 + $0x5] sm:$0x1]
          %v296 = vld [vmem:[%s260 + $0x6] sm:$0x1]
          %v297 = vld [vmem:[%s260 + $0x7] sm:$0x1]
          %v298 = vld [vmem:[%s260 + $0x8] sm:$0x1]
          %v299 = vld [vmem:[%s260 + $0x9] sm:$0x1]
          %v300 = vld [vmem:[%s260 + $0xa] sm:$0x1]
          %v301 = vld [vmem:[%s260 + $0xb] sm:$0x1]
          %v302 = vld [vmem:[%s260 + $0xc] sm:$0x1]
          %v303 = vld [vmem:[%s260 + $0xd] sm:$0x1]
          %v304 = vld [vmem:[%s260 + $0xe] sm:$0x1]
          %v305 = vld [vmem:[%s260 + $0xf] sm:$0x1]
          %v306 = vld [vmem:[%s260 + $0x10] sm:$0x1]
          %v307 = vld [vmem:[%s260 + $0x11] sm:$0x1]
          %v308 = vld [vmem:[%s260 + $0x12] sm:$0x1]
          %v309 = vld [vmem:[%s260 + $0x13] sm:$0x1]
          %v310 = vld [vmem:[%s260 + $0x14] sm:$0x1]
          %v313 = vunpack.c.l.b16 %v288
          %v314 = vunpack.c.l.b16 %v289
          %v315 = vpack.c.b16 %v314, %v313
          %vm316 = vcmask 15360
          %v318 = vsel %vm316, %v315, 0
          %vm320 = vcmask 1040384
          %v322 = vsel %vm320, %v290, 0
          %324 = vmatprep.subr.bf16.mxu0 0
          %325 = vmatpush1.bf16.msra.mxu0 %v322
          %326 = vmatprep.subr.bf16.mxu0 0
          %327 = vmatpush1.bf16.msra.mxu0 0
          %328 = vmatprep.subr.bf16.mxu0 0
          %329 = vmatpush1.bf16.msra.mxu0 0
          %330 = vmatprep.subr.bf16.mxu0 0
          %331 = vmatpush1.bf16.msra.mxu0 0
          %332 = vmatprep.subr.bf16.mxu0 0
          %333 = vmatpush1.bf16.msra.mxu0 0
          %334 = vmatprep.subr.bf16.mxu0 0
          %335 = vmatpush1.bf16.msra.mxu0 0
          %336 = vmatprep.subr.bf16.mxu0 0
          %337 = vmatpush1.bf16.msra.mxu0 0
          %338 = vmatprep.subr.bf16.mxu0 0
          %339 = vmatpush1.bf16.msra.mxu0 0
          %340 = vmatprep.subr.bf16.mxu0 0
          %341 = vmatpush1.bf16.msra.mxu0 0
          %342 = vmatprep.subr.bf16.mxu0 0
          %343 = vmatpush1.bf16.msra.mxu0 0
          %344 = vmatprep.subr.bf16.mxu0 0
          %345 = vmatpush1.bf16.msra.mxu0 0
          %346 = vmatprep.subr.bf16.mxu0 0
          %347 = vmatpush1.bf16.msra.mxu0 0
          %348 = vmatprep.subr.bf16.mxu0 0
          %349 = vmatpush1.bf16.msra.mxu0 0
          %350 = vmatprep.subr.bf16.mxu0 0
          %351 = vmatpush1.bf16.msra.mxu0 0
          %352 = vmatprep.subr.bf16.mxu0 0
          %353 = vmatpush1.bf16.msra.mxu0 0
          %354 = vmatprep.subr.bf16.mxu0 0
          %355 = vmatpush1.bf16.msra.mxu0 0
          %356 = vmatprep.mubr.bf16.mxu0 0
          %357 = vmatmul.mubr.bf16.gmra.mrb[0].mxu0 %v318
          %v358 = vpop.f32.mrb[0].mxu0
          %v359 = vadd.f32 0.0, %v358
          %v360 = vpop.f32.mrb[0].mxu0
          %v361 = vpop.f32.mrb[0].mxu0
          %v362 = vadd.f32 0.0, %v361
          %v363 = vpop.f32.mrb[0].mxu0
          %364 = vdwg.mxu0
          %v366 = vsel %vm320, %v291, 0
          %368 = vmatprep.subr.bf16.mxu0 0
          %369 = vmatpush1.bf16.msra.mxu0 %v366
          %370 = vmatprep.subr.bf16.mxu0 0
          %371 = vmatpush1.bf16.msra.mxu0 0
          %372 = vmatprep.subr.bf16.mxu0 0
          %373 = vmatpush1.bf16.msra.mxu0 0
          %374 = vmatprep.subr.bf16.mxu0 0
          %375 = vmatpush1.bf16.msra.mxu0 0
          %376 = vmatprep.subr.bf16.mxu0 0
          %377 = vmatpush1.bf16.msra.mxu0 0
          %378 = vmatprep.subr.bf16.mxu0 0
          %379 = vmatpush1.bf16.msra.mxu0 0
          %380 = vmatprep.subr.bf16.mxu0 0
          %381 = vmatpush1.bf16.msra.mxu0 0
          %382 = vmatprep.subr.bf16.mxu0 0
          %383 = vmatpush1.bf16.msra.mxu0 0
          %384 = vmatprep.subr.bf16.mxu0 0
          %385 = vmatpush1.bf16.msra.mxu0 0
          %386 = vmatprep.subr.bf16.mxu0 0
          %387 = vmatpush1.bf16.msra.mxu0 0
          %388 = vmatprep.subr.bf16.mxu0 0
          %389 = vmatpush1.bf16.msra.mxu0 0
          %390 = vmatprep.subr.bf16.mxu0 0
          %391 = vmatpush1.bf16.msra.mxu0 0
          %392 = vmatprep.subr.bf16.mxu0 0
          %393 = vmatpush1.bf16.msra.mxu0 0
          %394 = vmatprep.subr.bf16.mxu0 0
          %395 = vmatpush1.bf16.msra.mxu0 0
          %396 = vmatprep.subr.bf16.mxu0 0
          %397 = vmatpush1.bf16.msra.mxu0 0
          %398 = vmatprep.subr.bf16.mxu0 0
          %399 = vmatpush1.bf16.msra.mxu0 0
          %400 = vmatprep.mubr.bf16.mxu0 0
          %401 = vmatmul.mubr.bf16.gmra.mrb[0].mxu0 %v318
          %v402 = vpop.f32.mrb[0].mxu0
          %v403 = vadd.f32 0.0, %v402
          %v404 = vpop.f32.mrb[0].mxu0
          %v405 = vpop.f32.mrb[0].mxu0
          %v406 = vadd.f32 0.0, %v405
          %v407 = vpop.f32.mrb[0].mxu0
          %408 = vdwg.mxu0
          %v410 = vsel %vm320, %v292, 0
          %412 = vmatprep.subr.bf16.mxu0 0
          %413 = vmatpush1.bf16.msra.mxu0 %v410
          %414 = vmatprep.subr.bf16.mxu0 0
          %415 = vmatpush1.bf16.msra.mxu0 0
          %416 = vmatprep.subr.bf16.mxu0 0
          %417 = vmatpush1.bf16.msra.mxu0 0
          %418 = vmatprep.subr.bf16.mxu0 0
          %419 = vmatpush1.bf16.msra.mxu0 0
          %420 = vmatprep.subr.bf16.mxu0 0
          %421 = vmatpush1.bf16.msra.mxu0 0
          %422 = vmatprep.subr.bf16.mxu0 0
          %423 = vmatpush1.bf16.msra.mxu0 0
          %424 = vmatprep.subr.bf16.mxu0 0
          %425 = vmatpush1.bf16.msra.mxu0 0
          %426 = vmatprep.subr.bf16.mxu0 0
          %427 = vmatpush1.bf16.msra.mxu0 0
          %428 = vmatprep.subr.bf16.mxu0 0
          %429 = vmatpush1.bf16.msra.mxu0 0
          %430 = vmatprep.subr.bf16.mxu0 0
          %431 = vmatpush1.bf16.msra.mxu0 0
          %432 = vmatprep.subr.bf16.mxu0 0
          %433 = vmatpush1.bf16.msra.mxu0 0
          %434 = vmatprep.subr.bf16.mxu0 0
          %435 = vmatpush1.bf16.msra.mxu0 0
          %436 = vmatprep.subr.bf16.mxu0 0
          %437 = vmatpush1.bf16.msra.mxu0 0
          %438 = vmatprep.subr.bf16.mxu0 0
          %439 = vmatpush1.bf16.msra.mxu0 0
          %440 = vmatprep.subr.bf16.mxu0 0
          %441 = vmatpush1.bf16.msra.mxu0 0
          %442 = vmatprep.subr.bf16.mxu0 0
          %443 = vmatpush1.bf16.msra.mxu0 0
          %444 = vmatprep.mubr.bf16.mxu0 0
          %445 = vmatmul.mubr.bf16.gmra.mrb[0].mxu0 %v318
          %v446 = vpop.f32.mrb[0].mxu0
          %v447 = vadd.f32 0.0, %v446
          %v448 = vpop.f32.mrb[0].mxu0
          %v449 = vpop.f32.mrb[0].mxu0
          %v450 = vadd.f32 0.0, %v449
          %v451 = vpop.f32.mrb[0].mxu0
          %452 = vdwg.mxu0
          %v454 = vsel %vm320, %v293, 0
          %456 = vmatprep.subr.bf16.mxu0 0
          %457 = vmatpush1.bf16.msra.mxu0 %v454
          %458 = vmatprep.subr.bf16.mxu0 0
          %459 = vmatpush1.bf16.msra.mxu0 0
          %460 = vmatprep.subr.bf16.mxu0 0
          %461 = vmatpush1.bf16.msra.mxu0 0
          %462 = vmatprep.subr.bf16.mxu0 0
          %463 = vmatpush1.bf16.msra.mxu0 0
          %464 = vmatprep.subr.bf16.mxu0 0
          %465 = vmatpush1.bf16.msra.mxu0 0
          %466 = vmatprep.subr.bf16.mxu0 0
          %467 = vmatpush1.bf16.msra.mxu0 0
          %468 = vmatprep.subr.bf16.mxu0 0
          %469 = vmatpush1.bf16.msra.mxu0 0
          %470 = vmatprep.subr.bf16.mxu0 0
          %471 = vmatpush1.bf16.msra.mxu0 0
          %472 = vmatprep.subr.bf16.mxu0 0
          %473 = vmatpush1.bf16.msra.mxu0 0
          %474 = vmatprep.subr.bf16.mxu0 0
          %475 = vmatpush1.bf16.msra.mxu0 0
          %476 = vmatprep.subr.bf16.mxu0 0
          %477 = vmatpush1.bf16.msra.mxu0 0
          %478 = vmatprep.subr.bf16.mxu0 0
          %479 = vmatpush1.bf16.msra.mxu0 0
          %480 = vmatprep.subr.bf16.mxu0 0
          %481 = vmatpush1.bf16.msra.mxu0 0
          %482 = vmatprep.subr.bf16.mxu0 0
          %483 = vmatpush1.bf16.msra.mxu0 0
          %484 = vmatprep.subr.bf16.mxu0 0
          %485 = vmatpush1.bf16.msra.mxu0 0
          %486 = vmatprep.subr.bf16.mxu0 0
          %487 = vmatpush1.bf16.msra.mxu0 0
          %488 = vmatprep.mubr.bf16.mxu0 0
          %489 = vmatmul.mubr.bf16.gmra.mrb[0].mxu0 %v318
          %v490 = vpop.f32.mrb[0].mxu0
          %v491 = vadd.f32 0.0, %v490
          %v492 = vpop.f32.mrb[0].mxu0
          %v493 = vpop.f32.mrb[0].mxu0
          %v494 = vadd.f32 0.0, %v493
          %v495 = vpop.f32.mrb[0].mxu0
          %496 = vdwg.mxu0
          %v498 = vsel %vm320, %v294, 0
          %500 = vmatprep.subr.bf16.mxu0 0
          %501 = vmatpush1.bf16.msra.mxu0 %v498
          %502 = vmatprep.subr.bf16.mxu0 0
          %503 = vmatpush1.bf16.msra.mxu0 0
          %504 = vmatprep.subr.bf16.mxu0 0
          %505 = vmatpush1.bf16.msra.mxu0 0
          %506 = vmatprep.subr.bf16.mxu0 0
          %507 = vmatpush1.bf16.msra.mxu0 0
          %508 = vmatprep.subr.bf16.mxu0 0
          %509 = vmatpush1.bf16.msra.mxu0 0
          %510 = vmatprep.subr.bf16.mxu0 0
          %511 = vmatpush1.bf16.msra.mxu0 0
          %512 = vmatprep.subr.bf16.mxu0 0
          %513 = vmatpush1.bf16.msra.mxu0 0
          %514 = vmatprep.subr.bf16.mxu0 0
          %515 = vmatpush1.bf16.msra.mxu0 0
          %516 = vmatprep.subr.bf16.mxu0 0
          %517 = vmatpush1.bf16.msra.mxu0 0
          %518 = vmatprep.subr.bf16.mxu0 0
          %519 = vmatpush1.bf16.msra.mxu0 0
          %520 = vmatprep.subr.bf16.mxu0 0
          %521 = vmatpush1.bf16.msra.mxu0 0
          %522 = vmatprep.subr.bf16.mxu0 0
          %523 = vmatpush1.bf16.msra.mxu0 0
          %524 = vmatprep.subr.bf16.mxu0 0
          %525 = vmatpush1.bf16.msra.mxu0 0
          %526 = vmatprep.subr.bf16.mxu0 0
          %527 = vmatpush1.bf16.msra.mxu0 0
          %528 = vmatprep.subr.bf16.mxu0 0
          %529 = vmatpush1.bf16.msra.mxu0 0
          %530 = vmatprep.subr.bf16.mxu0 0
          %531 = vmatpush1.bf16.msra.mxu0 0
          %532 = vmatprep.mubr.bf16.mxu0 0
          %533 = vmatmul.mubr.bf16.gmra.mrb[0].mxu0 %v318
          %v534 = vpop.f32.mrb[0].mxu0
          %v535 = vadd.f32 0.0, %v534
          %v536 = vpop.f32.mrb[0].mxu0
          %v537 = vpop.f32.mrb[0].mxu0
          %v538 = vadd.f32 0.0, %v537
          %v539 = vpop.f32.mrb[0].mxu0
          %540 = vdwg.mxu0
          %v542 = vsel %vm320, %v295, 0
          %544 = vmatprep.subr.bf16.mxu0 0
          %545 = vmatpush1.bf16.msra.mxu0 %v542
          %546 = vmatprep.subr.bf16.mxu0 0
          %547 = vmatpush1.bf16.msra.mxu0 0
          %548 = vmatprep.subr.bf16.mxu0 0
          %549 = vmatpush1.bf16.msra.mxu0 0
          %550 = vmatprep.subr.bf16.mxu0 0
          %551 = vmatpush1.bf16.msra.mxu0 0
          %552 = vmatprep.subr.bf16.mxu0 0
          %553 = vmatpush1.bf16.msra.mxu0 0
          %554 = vmatprep.subr.bf16.mxu0 0
          %555 = vmatpush1.bf16.msra.mxu0 0
          %556 = vmatprep.subr.bf16.mxu0 0
          %557 = vmatpush1.bf16.msra.mxu0 0
          %558 = vmatprep.subr.bf16.mxu0 0
          %559 = vmatpush1.bf16.msra.mxu0 0
          %560 = vmatprep.subr.bf16.mxu0 0
          %561 = vmatpush1.bf16.msra.mxu0 0
          %562 = vmatprep.subr.bf16.mxu0 0
          %563 = vmatpush1.bf16.msra.mxu0 0
          %564 = vmatprep.subr.bf16.mxu0 0
          %565 = vmatpush1.bf16.msra.mxu0 0
          %566 = vmatprep.subr.bf16.mxu0 0
          %567 = vmatpush1.bf16.msra.mxu0 0
          %568 = vmatprep.subr.bf16.mxu0 0
          %569 = vmatpush1.bf16.msra.mxu0 0
          %570 = vmatprep.subr.bf16.mxu0 0
          %571 = vmatpush1.bf16.msra.mxu0 0
          %572 = vmatprep.subr.bf16.mxu0 0
          %573 = vmatpush1.bf16.msra.mxu0 0
          %574 = vmatprep.subr.bf16.mxu0 0
          %575 = vmatpush1.bf16.msra.mxu0 0
          %576 = vmatprep.mubr.bf16.mxu0 0
          %577 = vmatmul.mubr.bf16.gmra.mrb[0].mxu0 %v318
          %v578 = vpop.f32.mrb[0].mxu0
          %v579 = vadd.f32 0.0, %v578
          %v580 = vpop.f32.mrb[0].mxu0
          %v581 = vpop.f32.mrb[0].mxu0
          %v582 = vadd.f32 0.0, %v581
          %v583 = vpop.f32.mrb[0].mxu0
          %584 = vdwg.mxu0
          %v586 = vsel %vm320, %v296, 0
          %588 = vmatprep.subr.bf16.mxu0 0
          %589 = vmatpush1.bf16.msra.mxu0 %v586
          %590 = vmatprep.subr.bf16.mxu0 0
          %591 = vmatpush1.bf16.msra.mxu0 0
          %592 = vmatprep.subr.bf16.mxu0 0
          %593 = vmatpush1.bf16.msra.mxu0 0
          %594 = vmatprep.subr.bf16.mxu0 0
          %595 = vmatpush1.bf16.msra.mxu0 0
          %596 = vmatprep.subr.bf16.mxu0 0
          %597 = vmatpush1.bf16.msra.mxu0 0
          %598 = vmatprep.subr.bf16.mxu0 0
          %599 = vmatpush1.bf16.msra.mxu0 0
          %600 = vmatprep.subr.bf16.mxu0 0
          %601 = vmatpush1.bf16.msra.mxu0 0
          %602 = vmatprep.subr.bf16.mxu0 0
          %603 = vmatpush1.bf16.msra.mxu0 0
          %604 = vmatprep.subr.bf16.mxu0 0
          %605 = vmatpush1.bf16.msra.mxu0 0
          %606 = vmatprep.subr.bf16.mxu0 0
          %607 = vmatpush1.bf16.msra.mxu0 0
          %608 = vmatprep.subr.bf16.mxu0 0
          %609 = vmatpush1.bf16.msra.mxu0 0
          %610 = vmatprep.subr.bf16.mxu0 0
          %611 = vmatpush1.bf16.msra.mxu0 0
          %612 = vmatprep.subr.bf16.mxu0 0
          %613 = vmatpush1.bf16.msra.mxu0 0
          %614 = vmatprep.subr.bf16.mxu0 0
          %615 = vmatpush1.bf16.msra.mxu0 0
          %616 = vmatprep.subr.bf16.mxu0 0
          %617 = vmatpush1.bf16.msra.mxu0 0
          %618 = vmatprep.subr.bf16.mxu0 0
          %619 = vmatpush1.bf16.msra.mxu0 0
          %620 = vmatprep.mubr.bf16.mxu0 0
          %621 = vmatmul.mubr.bf16.gmra.mrb[0].mxu0 %v318
          %v622 = vpop.f32.mrb[0].mxu0
          %v623 = vadd.f32 0.0, %v622
          %v624 = vpop.f32.mrb[0].mxu0
          %v625 = vpop.f32.mrb[0].mxu0
          %v626 = vadd.f32 0.0, %v625
          %v627 = vpop.f32.mrb[0].mxu0
          %628 = vdwg.mxu0
          %v630 = vsel %vm320, %v297, 0
          %632 = vmatprep.subr.bf16.mxu0 0
          %633 = vmatpush1.bf16.msra.mxu0 %v630
          %634 = vmatprep.subr.bf16.mxu0 0
          %635 = vmatpush1.bf16.msra.mxu0 0
          %636 = vmatprep.subr.bf16.mxu0 0
          %637 = vmatpush1.bf16.msra.mxu0 0
          %638 = vmatprep.subr.bf16.mxu0 0
          %639 = vmatpush1.bf16.msra.mxu0 0
          %640 = vmatprep.subr.bf16.mxu0 0
          %641 = vmatpush1.bf16.msra.mxu0 0
          %642 = vmatprep.subr.bf16.mxu0 0
          %643 = vmatpush1.bf16.msra.mxu0 0
          %644 = vmatprep.subr.bf16.mxu0 0
          %645 = vmatpush1.bf16.msra.mxu0 0
          %646 = vmatprep.subr.bf16.mxu0 0
          %647 = vmatpush1.bf16.msra.mxu0 0
          %648 = vmatprep.subr.bf16.mxu0 0
          %649 = vmatpush1.bf16.msra.mxu0 0
          %650 = vmatprep.subr.bf16.mxu0 0
          %651 = vmatpush1.bf16.msra.mxu0 0
          %652 = vmatprep.subr.bf16.mxu0 0
          %653 = vmatpush1.bf16.msra.mxu0 0
          %654 = vmatprep.subr.bf16.mxu0 0
          %655 = vmatpush1.bf16.msra.mxu0 0
          %656 = vmatprep.subr.bf16.mxu0 0
          %657 = vmatpush1.bf16.msra.mxu0 0
          %658 = vmatprep.subr.bf16.mxu0 0
          %659 = vmatpush1.bf16.msra.mxu0 0
          %660 = vmatprep.subr.bf16.mxu0 0
          %661 = vmatpush1.bf16.msra.mxu0 0
          %662 = vmatprep.subr.bf16.mxu0 0
          %663 = vmatpush1.bf16.msra.mxu0 0
          %664 = vmatprep.mubr.bf16.mxu0 0
          %665 = vmatmul.mubr.bf16.gmra.mrb[0].mxu0 %v318
          %v666 = vpop.f32.mrb[0].mxu0
          %v667 = vadd.f32 0.0, %v666
          %v668 = vpop.f32.mrb[0].mxu0
          %v669 = vpop.f32.mrb[0].mxu0
          %v670 = vadd.f32 0.0, %v669
          %v671 = vpop.f32.mrb[0].mxu0
          %672 = vdwg.mxu0
          %v674 = vsel %vm320, %v298, 0
          %676 = vmatprep.subr.bf16.mxu0 0
          %677 = vmatpush1.bf16.msra.mxu0 %v674
          %678 = vmatprep.subr.bf16.mxu0 0
          %679 = vmatpush1.bf16.msra.mxu0 0
          %680 = vmatprep.subr.bf16.mxu0 0
          %681 = vmatpush1.bf16.msra.mxu0 0
          %682 = vmatprep.subr.bf16.mxu0 0
          %683 = vmatpush1.bf16.msra.mxu0 0
          %684 = vmatprep.subr.bf16.mxu0 0
          %685 = vmatpush1.bf16.msra.mxu0 0
          %686 = vmatprep.subr.bf16.mxu0 0
          %687 = vmatpush1.bf16.msra.mxu0 0
          %688 = vmatprep.subr.bf16.mxu0 0
          %689 = vmatpush1.bf16.msra.mxu0 0
          %690 = vmatprep.subr.bf16.mxu0 0
          %691 = vmatpush1.bf16.msra.mxu0 0
          %692 = vmatprep.subr.bf16.mxu0 0
          %693 = vmatpush1.bf16.msra.mxu0 0
          %694 = vmatprep.subr.bf16.mxu0 0
          %695 = vmatpush1.bf16.msra.mxu0 0
          %696 = vmatprep.subr.bf16.mxu0 0
          %697 = vmatpush1.bf16.msra.mxu0 0
          %698 = vmatprep.subr.bf16.mxu0 0
          %699 = vmatpush1.bf16.msra.mxu0 0
          %700 = vmatprep.subr.bf16.mxu0 0
          %701 = vmatpush1.bf16.msra.mxu0 0
          %702 = vmatprep.subr.bf16.mxu0 0
          %703 = vmatpush1.bf16.msra.mxu0 0
          %704 = vmatprep.subr.bf16.mxu0 0
          %705 = vmatpush1.bf16.msra.mxu0 0
          %706 = vmatprep.subr.bf16.mxu0 0
          %707 = vmatpush1.bf16.msra.mxu0 0
          %708 = vmatprep.mubr.bf16.mxu0 0
          %709 = vmatmul.mubr.bf16.gmra.mrb[0].mxu0 %v318
          %v710 = vpop.f32.mrb[0].mxu0
          %v711 = vadd.f32 0.0, %v710
          %v712 = vpop.f32.mrb[0].mxu0
          %v713 = vpop.f32.mrb[0].mxu0
          %v714 = vadd.f32 0.0, %v713
          %v715 = vpop.f32.mrb[0].mxu0
          %716 = vdwg.mxu0
          %v718 = vsel %vm320, %v299, 0
          %720 = vmatprep.subr.bf16.mxu0 0
          %721 = vmatpush1.bf16.msra.mxu0 %v718
          %722 = vmatprep.subr.bf16.mxu0 0
          %723 = vmatpush1.bf16.msra.mxu0 0
          %724 = vmatprep.subr.bf16.mxu0 0
          %725 = vmatpush1.bf16.msra.mxu0 0
          %726 = vmatprep.subr.bf16.mxu0 0
          %727 = vmatpush1.bf16.msra.mxu0 0
          %728 = vmatprep.subr.bf16.mxu0 0
          %729 = vmatpush1.bf16.msra.mxu0 0
          %730 = vmatprep.subr.bf16.mxu0 0
          %731 = vmatpush1.bf16.msra.mxu0 0
          %732 = vmatprep.subr.bf16.mxu0 0
          %733 = vmatpush1.bf16.msra.mxu0 0
          %734 = vmatprep.subr.bf16.mxu0 0
          %735 = vmatpush1.bf16.msra.mxu0 0
          %736 = vmatprep.subr.bf16.mxu0 0
          %737 = vmatpush1.bf16.msra.mxu0 0
          %738 = vmatprep.subr.bf16.mxu0 0
          %739 = vmatpush1.bf16.msra.mxu0 0
          %740 = vmatprep.subr.bf16.mxu0 0
          %741 = vmatpush1.bf16.msra.mxu0 0
          %742 = vmatprep.subr.bf16.mxu0 0
          %743 = vmatpush1.bf16.msra.mxu0 0
          %744 = vmatprep.subr.bf16.mxu0 0
          %745 = vmatpush1.bf16.msra.mxu0 0
          %746 = vmatprep.subr.bf16.mxu0 0
          %747 = vmatpush1.bf16.msra.mxu0 0
          %748 = vmatprep.subr.bf16.mxu0 0
          %749 = vmatpush1.bf16.msra.mxu0 0
          %750 = vmatprep.subr.bf16.mxu0 0
          %751 = vmatpush1.bf16.msra.mxu0 0
          %752 = vmatprep.mubr.bf16.mxu0 0
          %753 = vmatmul.mubr.bf16.gmra.mrb[0].mxu0 %v318
          %v754 = vpop.f32.mrb[0].mxu0
          %v755 = vadd.f32 0.0, %v754
          %v756 = vpop.f32.mrb[0].mxu0
          %v757 = vpop.f32.mrb[0].mxu0
          %v758 = vadd.f32 0.0, %v757
          %v759 = vpop.f32.mrb[0].mxu0
          %760 = vdwg.mxu0
          %v762 = vsel %vm320, %v300, 0
          %764 = vmatprep.subr.bf16.mxu0 0
          %765 = vmatpush1.bf16.msra.mxu0 %v762
          %766 = vmatprep.subr.bf16.mxu0 0
          %767 = vmatpush1.bf16.msra.mxu0 0
          %768 = vmatprep.subr.bf16.mxu0 0
          %769 = vmatpush1.bf16.msra.mxu0 0
          %770 = vmatprep.subr.bf16.mxu0 0
          %771 = vmatpush1.bf16.msra.mxu0 0
          %772 = vmatprep.subr.bf16.mxu0 0
          %773 = vmatpush1.bf16.msra.mxu0 0
          %774 = vmatprep.subr.bf16.mxu0 0
          %775 = vmatpush1.bf16.msra.mxu0 0
          %776 = vmatprep.subr.bf16.mxu0 0
          %777 = vmatpush1.bf16.msra.mxu0 0
          %778 = vmatprep.subr.bf16.mxu0 0
          %779 = vmatpush1.bf16.msra.mxu0 0
          %780 = vmatprep.subr.bf16.mxu0 0
          %781 = vmatpush1.bf16.msra.mxu0 0
          %782 = vmatprep.subr.bf16.mxu0 0
          %783 = vmatpush1.bf16.msra.mxu0 0
          %784 = vmatprep.subr.bf16.mxu0 0
          %785 = vmatpush1.bf16.msra.mxu0 0
          %786 = vmatprep.subr.bf16.mxu0 0
          %787 = vmatpush1.bf16.msra.mxu0 0
          %788 = vmatprep.subr.bf16.mxu0 0
          %789 = vmatpush1.bf16.msra.mxu0 0
          %790 = vmatprep.subr.bf16.mxu0 0
          %791 = vmatpush1.bf16.msra.mxu0 0
          %792 = vmatprep.subr.bf16.mxu0 0
          %793 = vmatpush1.bf16.msra.mxu0 0
          %794 = vmatprep.subr.bf16.mxu0 0
          %795 = vmatpush1.bf16.msra.mxu0 0
          %796 = vmatprep.mubr.bf16.mxu0 0
          %797 = vmatmul.mubr.bf16.gmra.mrb[0].mxu0 %v318
          %v798 = vpop.f32.mrb[0].mxu0
          %v799 = vadd.f32 0.0, %v798
          %v800 = vpop.f32.mrb[0].mxu0
          %v801 = vpop.f32.mrb[0].mxu0
          %v802 = vadd.f32 0.0, %v801
          %v803 = vpop.f32.mrb[0].mxu0
          %804 = vdwg.mxu0
          %v806 = vsel %vm320, %v301, 0
          %808 = vmatprep.subr.bf16.mxu0 0
          %809 = vmatpush1.bf16.msra.mxu0 %v806
          %810 = vmatprep.subr.bf16.mxu0 0
          %811 = vmatpush1.bf16.msra.mxu0 0
          %812 = vmatprep.subr.bf16.mxu0 0
          %813 = vmatpush1.bf16.msra.mxu0 0
          %814 = vmatprep.subr.bf16.mxu0 0
          %815 = vmatpush1.bf16.msra.mxu0 0
          %816 = vmatprep.subr.bf16.mxu0 0
          %817 = vmatpush1.bf16.msra.mxu0 0
          %818 = vmatprep.subr.bf16.mxu0 0
          %819 = vmatpush1.bf16.msra.mxu0 0
          %820 = vmatprep.subr.bf16.mxu0 0
          %821 = vmatpush1.bf16.msra.mxu0 0
          %822 = vmatprep.subr.bf16.mxu0 0
          %823 = vmatpush1.bf16.msra.mxu0 0
          %824 = vmatprep.subr.bf16.mxu0 0
          %825 = vmatpush1.bf16.msra.mxu0 0
          %826 = vmatprep.subr.bf16.mxu0 0
          %827 = vmatpush1.bf16.msra.mxu0 0
          %828 = vmatprep.subr.bf16.mxu0 0
          %829 = vmatpush1.bf16.msra.mxu0 0
          %830 = vmatprep.subr.bf16.mxu0 0
          %831 = vmatpush1.bf16.msra.mxu0 0
          %832 = vmatprep.subr.bf16.mxu0 0
          %833 = vmatpush1.bf16.msra.mxu0 0
          %834 = vmatprep.subr.bf16.mxu0 0
          %835 = vmatpush1.bf16.msra.mxu0 0
          %836 = vmatprep.subr.bf16.mxu0 0
          %837 = vmatpush1.bf16.msra.mxu0 0
          %838 = vmatprep.subr.bf16.mxu0 0
          %839 = vmatpush1.bf16.msra.mxu0 0
          %840 = vmatprep.mubr.bf16.mxu0 0
          %841 = vmatmul.mubr.bf16.gmra.mrb[0].mxu0 %v318
          %v842 = vpop.f32.mrb[0].mxu0
          %v843 = vadd.f32 0.0, %v842
          %v844 = vpop.f32.mrb[0].mxu0
          %v845 = vpop.f32.mrb[0].mxu0
          %v846 = vadd.f32 0.0, %v845
          %v847 = vpop.f32.mrb[0].mxu0
          %848 = vdwg.mxu0
          %v850 = vsel %vm320, %v302, 0
          %852 = vmatprep.subr.bf16.mxu0 0
          %853 = vmatpush1.bf16.msra.mxu0 %v850
          %854 = vmatprep.subr.bf16.mxu0 0
          %855 = vmatpush1.bf16.msra.mxu0 0
          %856 = vmatprep.subr.bf16.mxu0 0
          %857 = vmatpush1.bf16.msra.mxu0 0
          %858 = vmatprep.subr.bf16.mxu0 0
          %859 = vmatpush1.bf16.msra.mxu0 0
          %860 = vmatprep.subr.bf16.mxu0 0
          %861 = vmatpush1.bf16.msra.mxu0 0
          %862 = vmatprep.subr.bf16.mxu0 0
          %863 = vmatpush1.bf16.msra.mxu0 0
          %864 = vmatprep.subr.bf16.mxu0 0
          %865 = vmatpush1.bf16.msra.mxu0 0
          %866 = vmatprep.subr.bf16.mxu0 0
          %867 = vmatpush1.bf16.msra.mxu0 0
          %868 = vmatprep.subr.bf16.mxu0 0
          %869 = vmatpush1.bf16.msra.mxu0 0
          %870 = vmatprep.subr.bf16.mxu0 0
          %871 = vmatpush1.bf16.msra.mxu0 0
          %872 = vmatprep.subr.bf16.mxu0 0
          %873 = vmatpush1.bf16.msra.mxu0 0
          %874 = vmatprep.subr.bf16.mxu0 0
          %875 = vmatpush1.bf16.msra.mxu0 0
          %876 = vmatprep.subr.bf16.mxu0 0
          %877 = vmatpush1.bf16.msra.mxu0 0
          %878 = vmatprep.subr.bf16.mxu0 0
          %879 = vmatpush1.bf16.msra.mxu0 0
          %880 = vmatprep.subr.bf16.mxu0 0
          %881 = vmatpush1.bf16.msra.mxu0 0
          %882 = vmatprep.subr.bf16.mxu0 0
          %883 = vmatpush1.bf16.msra.mxu0 0
          %884 = vmatprep.mubr.bf16.mxu0 0
          %885 = vmatmul.mubr.bf16.gmra.mrb[0].mxu0 %v318
          %v886 = vpop.f32.mrb[0].mxu0
          %v887 = vadd.f32 0.0, %v886
          %v888 = vpop.f32.mrb[0].mxu0
          %v889 = vpop.f32.mrb[0].mxu0
          %v890 = vadd.f32 0.0, %v889
          %v891 = vpop.f32.mrb[0].mxu0
          %892 = vdwg.mxu0
          %v894 = vsel %vm320, %v303, 0
          %896 = vmatprep.subr.bf16.mxu0 0
          %897 = vmatpush1.bf16.msra.mxu0 %v894
          %898 = vmatprep.subr.bf16.mxu0 0
          %899 = vmatpush1.bf16.msra.mxu0 0
          %900 = vmatprep.subr.bf16.mxu0 0
          %901 = vmatpush1.bf16.msra.mxu0 0
          %902 = vmatprep.subr.bf16.mxu0 0
          %903 = vmatpush1.bf16.msra.mxu0 0
          %904 = vmatprep.subr.bf16.mxu0 0
          %905 = vmatpush1.bf16.msra.mxu0 0
          %906 = vmatprep.subr.bf16.mxu0 0
          %907 = vmatpush1.bf16.msra.mxu0 0
          %908 = vmatprep.subr.bf16.mxu0 0
          %909 = vmatpush1.bf16.msra.mxu0 0
          %910 = vmatprep.subr.bf16.mxu0 0
          %911 = vmatpush1.bf16.msra.mxu0 0
          %912 = vmatprep.subr.bf16.mxu0 0
          %913 = vmatpush1.bf16.msra.mxu0 0
          %914 = vmatprep.subr.bf16.mxu0 0
          %915 = vmatpush1.bf16.msra.mxu0 0
          %916 = vmatprep.subr.bf16.mxu0 0
          %917 = vmatpush1.bf16.msra.mxu0 0
          %918 = vmatprep.subr.bf16.mxu0 0
          %919 = vmatpush1.bf16.msra.mxu0 0
          %920 = vmatprep.subr.bf16.mxu0 0
          %921 = vmatpush1.bf16.msra.mxu0 0
          %922 = vmatprep.subr.bf16.mxu0 0
          %923 = vmatpush1.bf16.msra.mxu0 0
          %924 = vmatprep.subr.bf16.mxu0 0
          %925 = vmatpush1.bf16.msra.mxu0 0
          %926 = vmatprep.subr.bf16.mxu0 0
          %927 = vmatpush1.bf16.msra.mxu0 0
          %928 = vmatprep.mubr.bf16.mxu0 0
          %929 = vmatmul.mubr.bf16.gmra.mrb[0].mxu0 %v318
          %v930 = vpop.f32.mrb[0].mxu0
          %v931 = vadd.f32 0.0, %v930
          %v932 = vpop.f32.mrb[0].mxu0
          %v933 = vpop.f32.mrb[0].mxu0
          %v934 = vadd.f32 0.0, %v933
          %v935 = vpop.f32.mrb[0].mxu0
          %936 = vdwg.mxu0
          %v938 = vsel %vm320, %v304, 0
          %940 = vmatprep.subr.bf16.mxu0 0
          %941 = vmatpush1.bf16.msra.mxu0 %v938
          %942 = vmatprep.subr.bf16.mxu0 0
          %943 = vmatpush1.bf16.msra.mxu0 0
          %944 = vmatprep.subr.bf16.mxu0 0
          %945 = vmatpush1.bf16.msra.mxu0 0
          %946 = vmatprep.subr.bf16.mxu0 0
          %947 = vmatpush1.bf16.msra.mxu0 0
          %948 = vmatprep.subr.bf16.mxu0 0
          %949 = vmatpush1.bf16.msra.mxu0 0
          %950 = vmatprep.subr.bf16.mxu0 0
          %951 = vmatpush1.bf16.msra.mxu0 0
          %952 = vmatprep.subr.bf16.mxu0 0
          %953 = vmatpush1.bf16.msra.mxu0 0
          %954 = vmatprep.subr.bf16.mxu0 0
          %955 = vmatpush1.bf16.msra.mxu0 0
          %956 = vmatprep.subr.bf16.mxu0 0
          %957 = vmatpush1.bf16.msra.mxu0 0
          %958 = vmatprep.subr.bf16.mxu0 0
          %959 = vmatpush1.bf16.msra.mxu0 0
          %960 = vmatprep.subr.bf16.mxu0 0
          %961 = vmatpush1.bf16.msra.mxu0 0
          %962 = vmatprep.subr.bf16.mxu0 0
          %963 = vmatpush1.bf16.msra.mxu0 0
          %964 = vmatprep.subr.bf16.mxu0 0
          %965 = vmatpush1.bf16.msra.mxu0 0
          %966 = vmatprep.subr.bf16.mxu0 0
          %967 = vmatpush1.bf16.msra.mxu0 0
          %968 = vmatprep.subr.bf16.mxu0 0
          %969 = vmatpush1.bf16.msra.mxu0 0
          %970 = vmatprep.subr.bf16.mxu0 0
          %971 = vmatpush1.bf16.msra.mxu0 0
          %972 = vmatprep.mubr.bf16.mxu0 0
          %973 = vmatmul.mubr.bf16.gmra.mrb[0].mxu0 %v318
          %v974 = vpop.f32.mrb[0].mxu0
          %v975 = vadd.f32 0.0, %v974
          %v976 = vpop.f32.mrb[0].mxu0
          %v977 = vpop.f32.mrb[0].mxu0
          %v978 = vadd.f32 0.0, %v977
          %v979 = vpop.f32.mrb[0].mxu0
          %980 = vdwg.mxu0
          %v982 = vsel %vm320, %v305, 0
          %984 = vmatprep.subr.bf16.mxu0 0
          %985 = vmatpush1.bf16.msra.mxu0 %v982
          %986 = vmatprep.subr.bf16.mxu0 0
          %987 = vmatpush1.bf16.msra.mxu0 0
          %988 = vmatprep.subr.bf16.mxu0 0
          %989 = vmatpush1.bf16.msra.mxu0 0
          %990 = vmatprep.subr.bf16.mxu0 0
          %991 = vmatpush1.bf16.msra.mxu0 0
          %992 = vmatprep.subr.bf16.mxu0 0
          %993 = vmatpush1.bf16.msra.mxu0 0
          %994 = vmatprep.subr.bf16.mxu0 0
          %995 = vmatpush1.bf16.msra.mxu0 0
          %996 = vmatprep.subr.bf16.mxu0 0
          %997 = vmatpush1.bf16.msra.mxu0 0
          %998 = vmatprep.subr.bf16.mxu0 0
          %999 = vmatpush1.bf16.msra.mxu0 0
          %1000 = vmatprep.subr.bf16.mxu0 0
          %1001 = vmatpush1.bf16.msra.mxu0 0
          %1002 = vmatprep.subr.bf16.mxu0 0
          %1003 = vmatpush1.bf16.msra.mxu0 0
          %1004 = vmatprep.subr.bf16.mxu0 0
          %1005 = vmatpush1.bf16.msra.mxu0 0
          %1006 = vmatprep.subr.bf16.mxu0 0
          %1007 = vmatpush1.bf16.msra.mxu0 0
          %1008 = vmatprep.subr.bf16.mxu0 0
          %1009 = vmatpush1.bf16.msra.mxu0 0
          %1010 = vmatprep.subr.bf16.mxu0 0
          %1011 = vmatpush1.bf16.msra.mxu0 0
          %1012 = vmatprep.subr.bf16.mxu0 0
          %1013 = vmatpush1.bf16.msra.mxu0 0
          %1014 = vmatprep.subr.bf16.mxu0 0
          %1015 = vmatpush1.bf16.msra.mxu0 0
          %1016 = vmatprep.mubr.bf16.mxu0 0
          %1017 = vmatmul.mubr.bf16.gmra.mrb[0].mxu0 %v318
          %v1018 = vpop.f32.mrb[0].mxu0
          %v1019 = vadd.f32 0.0, %v1018
          %v1020 = vpop.f32.mrb[0].mxu0
          %v1021 = vpop.f32.mrb[0].mxu0
          %v1022 = vadd.f32 0.0, %v1021
          %v1023 = vpop.f32.mrb[0].mxu0
          %1024 = vdwg.mxu0
          %v1026 = vsel %vm320, %v306, 0
          %1028 = vmatprep.subr.bf16.mxu0 0
          %1029 = vmatpush1.bf16.msra.mxu0 %v1026
          %1030 = vmatprep.subr.bf16.mxu0 0
          %1031 = vmatpush1.bf16.msra.mxu0 0
          %1032 = vmatprep.subr.bf16.mxu0 0
          %1033 = vmatpush1.bf16.msra.mxu0 0
          %1034 = vmatprep.subr.bf16.mxu0 0
          %1035 = vmatpush1.bf16.msra.mxu0 0
          %1036 = vmatprep.subr.bf16.mxu0 0
          %1037 = vmatpush1.bf16.msra.mxu0 0
          %1038 = vmatprep.subr.bf16.mxu0 0
          %1039 = vmatpush1.bf16.msra.mxu0 0
          %1040 = vmatprep.subr.bf16.mxu0 0
          %1041 = vmatpush1.bf16.msra.mxu0 0
          %1042 = vmatprep.subr.bf16.mxu0 0
          %1043 = vmatpush1.bf16.msra.mxu0 0
          %1044 = vmatprep.subr.bf16.mxu0 0
          %1045 = vmatpush1.bf16.msra.mxu0 0
          %1046 = vmatprep.subr.bf16.mxu0 0
          %1047 = vmatpush1.bf16.msra.mxu0 0
          %1048 = vmatprep.subr.bf16.mxu0 0
          %1049 = vmatpush1.bf16.msra.mxu0 0
          %1050 = vmatprep.subr.bf16.mxu0 0
          %1051 = vmatpush1.bf16.msra.mxu0 0
          %1052 = vmatprep.subr.bf16.mxu0 0
          %1053 = vmatpush1.bf16.msra.mxu0 0
          %1054 = vmatprep.subr.bf16.mxu0 0
          %1055 = vmatpush1.bf16.msra.mxu0 0
          %1056 = vmatprep.subr.bf16.mxu0 0
          %1057 = vmatpush1.bf16.msra.mxu0 0
          %1058 = vmatprep.subr.bf16.mxu0 0
          %1059 = vmatpush1.bf16.msra.mxu0 0
          %1060 = vmatprep.mubr.bf16.mxu0 0
          %1061 = vmatmul.mubr.bf16.gmra.mrb[0].mxu0 %v318
          %v1062 = vpop.f32.mrb[0].mxu0
          %v1063 = vadd.f32 0.0, %v1062
          %v1064 = vpop.f32.mrb[0].mxu0
          %v1065 = vpop.f32.mrb[0].mxu0
          %v1066 = vadd.f32 0.0, %v1065
          %v1067 = vpop.f32.mrb[0].mxu0
          %1068 = vdwg.mxu0
          %v1070 = vsel %vm320, %v307, 0
          %1072 = vmatprep.subr.bf16.mxu0 0
          %1073 = vmatpush1.bf16.msra.mxu0 %v1070
          %1074 = vmatprep.subr.bf16.mxu0 0
          %1075 = vmatpush1.bf16.msra.mxu0 0
          %1076 = vmatprep.subr.bf16.mxu0 0
          %1077 = vmatpush1.bf16.msra.mxu0 0
          %1078 = vmatprep.subr.bf16.mxu0 0
          %1079 = vmatpush1.bf16.msra.mxu0 0
          %1080 = vmatprep.subr.bf16.mxu0 0
          %1081 = vmatpush1.bf16.msra.mxu0 0
          %1082 = vmatprep.subr.bf16.mxu0 0
          %1083 = vmatpush1.bf16.msra.mxu0 0
          %1084 = vmatprep.subr.bf16.mxu0 0
          %1085 = vmatpush1.bf16.msra.mxu0 0
          %1086 = vmatprep.subr.bf16.mxu0 0
          %1087 = vmatpush1.bf16.msra.mxu0 0
          %1088 = vmatprep.subr.bf16.mxu0 0
          %1089 = vmatpush1.bf16.msra.mxu0 0
          %1090 = vmatprep.subr.bf16.mxu0 0
          %1091 = vmatpush1.bf16.msra.mxu0 0
          %1092 = vmatprep.subr.bf16.mxu0 0
          %1093 = vmatpush1.bf16.msra.mxu0 0
          %1094 = vmatprep.subr.bf16.mxu0 0
          %1095 = vmatpush1.bf16.msra.mxu0 0
          %1096 = vmatprep.subr.bf16.mxu0 0
          %1097 = vmatpush1.bf16.msra.mxu0 0
          %1098 = vmatprep.subr.bf16.mxu0 0
          %1099 = vmatpush1.bf16.msra.mxu0 0
          %1100 = vmatprep.subr.bf16.mxu0 0
          %1101 = vmatpush1.bf16.msra.mxu0 0
          %1102 = vmatprep.subr.bf16.mxu0 0
          %1103 = vmatpush1.bf16.msra.mxu0 0
          %1104 = vmatprep.mubr.bf16.mxu0 0
          %1105 = vmatmul.mubr.bf16.gmra.mrb[0].mxu0 %v318
          %v1106 = vpop.f32.mrb[0].mxu0
          %v1107 = vadd.f32 0.0, %v1106
          %v1108 = vpop.f32.mrb[0].mxu0
          %v1109 = vpop.f32.mrb[0].mxu0
          %v1110 = vadd.f32 0.0, %v1109
          %v1111 = vpop.f32.mrb[0].mxu0
          %1112 = vdwg.mxu0
          %v1114 = vsel %vm320, %v308, 0
          %1116 = vmatprep.subr.bf16.mxu0 0
          %1117 = vmatpush1.bf16.msra.mxu0 %v1114
          %1118 = vmatprep.subr.bf16.mxu0 0
          %1119 = vmatpush1.bf16.msra.mxu0 0
          %1120 = vmatprep.subr.bf16.mxu0 0
          %1121 = vmatpush1.bf16.msra.mxu0 0
          %1122 = vmatprep.subr.bf16.mxu0 0
          %1123 = vmatpush1.bf16.msra.mxu0 0
          %1124 = vmatprep.subr.bf16.mxu0 0
          %1125 = vmatpush1.bf16.msra.mxu0 0
          %1126 = vmatprep.subr.bf16.mxu0 0
          %1127 = vmatpush1.bf16.msra.mxu0 0
          %1128 = vmatprep.subr.bf16.mxu0 0
          %1129 = vmatpush1.bf16.msra.mxu0 0
          %1130 = vmatprep.subr.bf16.mxu0 0
          %1131 = vmatpush1.bf16.msra.mxu0 0
          %1132 = vmatprep.subr.bf16.mxu0 0
          %1133 = vmatpush1.bf16.msra.mxu0 0
          %1134 = vmatprep.subr.bf16.mxu0 0
          %1135 = vmatpush1.bf16.msra.mxu0 0
          %1136 = vmatprep.subr.bf16.mxu0 0
          %1137 = vmatpush1.bf16.msra.mxu0 0
          %1138 = vmatprep.subr.bf16.mxu0 0
          %1139 = vmatpush1.bf16.msra.mxu0 0
          %1140 = vmatprep.subr.bf16.mxu0 0
          %1141 = vmatpush1.bf16.msra.mxu0 0
          %1142 = vmatprep.subr.bf16.mxu0 0
          %1143 = vmatpush1.bf16.msra.mxu0 0
          %1144 = vmatprep.subr.bf16.mxu0 0
          %1145 = vmatpush1.bf16.msra.mxu0 0
          %1146 = vmatprep.subr.bf16.mxu0 0
          %1147 = vmatpush1.bf16.msra.mxu0 0
          %1148 = vmatprep.mubr.bf16.mxu0 0
          %1149 = vmatmul.mubr.bf16.gmra.mrb[0].mxu0 %v318
          %v1150 = vpop.f32.mrb[0].mxu0
          %v1151 = vadd.f32 0.0, %v1150
          %v1152 = vpop.f32.mrb[0].mxu0
          %v1153 = vpop.f32.mrb[0].mxu0
          %v1154 = vadd.f32 0.0, %v1153
          %v1155 = vpop.f32.mrb[0].mxu0
          %1156 = vdwg.mxu0
          %v1158 = vsel %vm320, %v309, 0
          %1160 = vmatprep.subr.bf16.mxu0 0
          %1161 = vmatpush1.bf16.msra.mxu0 %v1158
          %1162 = vmatprep.subr.bf16.mxu0 0
          %1163 = vmatpush1.bf16.msra.mxu0 0
          %1164 = vmatprep.subr.bf16.mxu0 0
          %1165 = vmatpush1.bf16.msra.mxu0 0
          %1166 = vmatprep.subr.bf16.mxu0 0
          %1167 = vmatpush1.bf16.msra.mxu0 0
          %1168 = vmatprep.subr.bf16.mxu0 0
          %1169 = vmatpush1.bf16.msra.mxu0 0
          %1170 = vmatprep.subr.bf16.mxu0 0
          %1171 = vmatpush1.bf16.msra.mxu0 0
          %1172 = vmatprep.subr.bf16.mxu0 0
          %1173 = vmatpush1.bf16.msra.mxu0 0
          %1174 = vmatprep.subr.bf16.mxu0 0
          %1175 = vmatpush1.bf16.msra.mxu0 0
          %1176 = vmatprep.subr.bf16.mxu0 0
          %1177 = vmatpush1.bf16.msra.mxu0 0
          %1178 = vmatprep.subr.bf16.mxu0 0
          %1179 = vmatpush1.bf16.msra.mxu0 0
          %1180 = vmatprep.subr.bf16.mxu0 0
          %1181 = vmatpush1.bf16.msra.mxu0 0
          %1182 = vmatprep.subr.bf16.mxu0 0
          %1183 = vmatpush1.bf16.msra.mxu0 0
          %1184 = vmatprep.subr.bf16.mxu0 0
          %1185 = vmatpush1.bf16.msra.mxu0 0
          %1186 = vmatprep.subr.bf16.mxu0 0
          %1187 = vmatpush1.bf16.msra.mxu0 0
          %1188 = vmatprep.subr.bf16.mxu0 0
          %1189 = vmatpush1.bf16.msra.mxu0 0
          %1190 = vmatprep.subr.bf16.mxu0 0
          %1191 = vmatpush1.bf16.msra.mxu0 0
          %1192 = vmatprep.mubr.bf16.mxu0 0
          %1193 = vmatmul.mubr.bf16.gmra.mrb[0].mxu0 %v318
          %v1194 = vpop.f32.mrb[0].mxu0
          %v1195 = vadd.f32 0.0, %v1194
          %v1196 = vpop.f32.mrb[0].mxu0
          %v1197 = vpop.f32.mrb[0].mxu0
          %v1198 = vadd.f32 0.0, %v1197
          %v1199 = vpop.f32.mrb[0].mxu0
          %1200 = vdwg.mxu0
          %v1202 = vsel %vm320, %v310, 0
          %1204 = vmatprep.subr.bf16.mxu0 0
          %1205 = vmatpush1.bf16.msra.mxu0 %v1202
          %1206 = vmatprep.subr.bf16.mxu0 0
          %1207 = vmatpush1.bf16.msra.mxu0 0
          %1208 = vmatprep.subr.bf16.mxu0 0
          %1209 = vmatpush1.bf16.msra.mxu0 0
          %1210 = vmatprep.subr.bf16.mxu0 0
          %1211 = vmatpush1.bf16.msra.mxu0 0
          %1212 = vmatprep.subr.bf16.mxu0 0
          %1213 = vmatpush1.bf16.msra.mxu0 0
          %1214 = vmatprep.subr.bf16.mxu0 0
          %1215 = vmatpush1.bf16.msra.mxu0 0
          %1216 = vmatprep.subr.bf16.mxu0 0
          %1217 = vmatpush1.bf16.msra.mxu0 0
          %1218 = vmatprep.subr.bf16.mxu0 0
          %1219 = vmatpush1.bf16.msra.mxu0 0
          %1220 = vmatprep.subr.bf16.mxu0 0
          %1221 = vmatpush1.bf16.msra.mxu0 0
          %1222 = vmatprep.subr.bf16.mxu0 0
          %1223 = vmatpush1.bf16.msra.mxu0 0
          %1224 = vmatprep.subr.bf16.mxu0 0
          %1225 = vmatpush1.bf16.msra.mxu0 0
          %1226 = vmatprep.subr.bf16.mxu0 0
          %1227 = vmatpush1.bf16.msra.mxu0 0
          %1228 = vmatprep.subr.bf16.mxu0 0
          %1229 = vmatpush1.bf16.msra.mxu0 0
          %1230 = vmatprep.subr.bf16.mxu0 0
          %1231 = vmatpush1.bf16.msra.mxu0 0
          %1232 = vmatprep.subr.bf16.mxu0 0
          %1233 = vmatpush1.bf16.msra.mxu0 0
          %1234 = vmatprep.subr.bf16.mxu0 0
          %1235 = vmatpush1.bf16.msra.mxu0 0
          %1236 = vmatprep.mubr.bf16.mxu0 0
          %1237 = vmatmul.mubr.bf16.gmra.mrb[0].mxu0 %v318
          %v1238 = vpop.f32.mrb[0].mxu0
          %v1239 = vadd.f32 0.0, %v1238
          %v1240 = vpop.f32.mrb[0].mxu0
          %v1241 = vpop.f32.mrb[0].mxu0
          %v1242 = vadd.f32 0.0, %v1241
          %v1243 = vpop.f32.mrb[0].mxu0
          %1244 = vdwg.mxu0
          %v1245 = vpack.c.bf16 %v362, %v359
          %v1246 = vpack.c.bf16 %v406, %v403
          %v1247 = vpack.c.bf16 %v450, %v447
          %v1248 = vpack.c.bf16 %v494, %v491
          %v1249 = vpack.c.bf16 %v538, %v535
          %v1250 = vpack.c.bf16 %v582, %v579
          %v1251 = vpack.c.bf16 %v626, %v623
          %v1252 = vpack.c.bf16 %v670, %v667
          %v1253 = vpack.c.bf16 %v714, %v711
          %v1254 = vpack.c.bf16 %v758, %v755
          %v1255 = vpack.c.bf16 %v802, %v799
          %v1256 = vpack.c.bf16 %v846, %v843
          %v1257 = vpack.c.bf16 %v890, %v887
          %v1258 = vpack.c.bf16 %v934, %v931
          %v1259 = vpack.c.bf16 %v978, %v975
          %v1260 = vpack.c.bf16 %v1022, %v1019
          %v1261 = vpack.c.bf16 %v1066, %v1063
          %v1262 = vpack.c.bf16 %v1110, %v1107
          %v1263 = vpack.c.bf16 %v1154, %v1151
          %v1264 = vpack.c.bf16 %v1198, %v1195
          %v1265 = vpack.c.bf16 %v1242, %v1239
          %1266 = vst.msk [vmem:[#allocation2] sm:$0xff] %vm316, %v1245
          %1267 = vst.msk [vmem:[#allocation2 + $0x8] sm:$0xff] %vm316, %v1246
          %1268 = vst.msk [vmem:[#allocation2 + $0x10] sm:$0xff] %vm316, %v1247
          %1269 = vst.msk [vmem:[#allocation2 + $0x18] sm:$0xff] %vm316, %v1248
          %1270 = vst.msk [vmem:[#allocation2 + $0x20] sm:$0xff] %vm316, %v1249
          %1271 = vst.msk [vmem:[#allocation2 + $0x28] sm:$0xff] %vm316, %v1250
          %1272 = vst.msk [vmem:[#allocation2 + $0x30] sm:$0xff] %vm316, %v1251
          %1273 = vst.msk [vmem:[#allocation2 + $0x38] sm:$0xff] %vm316, %v1252
          %1274 = vst.msk [vmem:[#allocation2 + $0x40] sm:$0xff] %vm316, %v1253
          %1275 = vst.msk [vmem:[#allocation2 + $0x48] sm:$0xff] %vm316, %v1254
          %1276 = vst.msk [vmem:[#allocation2 + $0x50] sm:$0xff] %vm316, %v1255
          %1277 = vst.msk [vmem:[#allocation2 + $0x58] sm:$0xff] %vm316, %v1256
          %1278 = vst.msk [vmem:[#allocation2 + $0x60] sm:$0xff] %vm316, %v1257
          %1279 = vst.msk [vmem:[#allocation2 + $0x68] sm:$0xff] %vm316, %v1258
          %1280 = vst.msk [vmem:[#allocation2 + $0x70] sm:$0xff] %vm316, %v1259
          %1281 = vst.msk [vmem:[#allocation2 + $0x78] sm:$0xff] %vm316, %v1260
          %1282 = vst.msk [vmem:[#allocation2 + $0x80] sm:$0xff] %vm316, %v1261
          %1283 = vst.msk [vmem:[#allocation2 + $0x88] sm:$0xff] %vm316, %v1262
          %1284 = vst.msk [vmem:[#allocation2 + $0x90] sm:$0xff] %vm316, %v1263
          %1285 = vst.msk [vmem:[#allocation2 + $0x98] sm:$0xff] %vm316, %v1264
          %1286 = vst.msk [vmem:[#allocation2 + $0xa0] sm:$0xff] %vm316, %v1265
        $region44: #{drn_instance_forward.3} parent=35 // pred_fallthru
          _
        %v1287 = vld [vmem:[#allocation2] sm:$0xff]
        %v1288 = vld [vmem:[#allocation2 + $0x8] sm:$0xff]
        %v1289 = vld [vmem:[#allocation2 + $0x10] sm:$0xff]
        %v1290 = vld [vmem:[#allocation2 + $0x18] sm:$0xff]
        %v1291 = vld [vmem:[#allocation2 + $0x20] sm:$0xff]
        %v1292 = vld [vmem:[#allocation2 + $0x28] sm:$0xff]
        %v1293 = vld [vmem:[#allocation2 + $0x30] sm:$0xff]
        %v1294 = vld [vmem:[#allocation2 + $0x38] sm:$0xff]
        %v1295 = vld [vmem:[#allocation2 + $0x40] sm:$0xff]
        %v1296 = vld [vmem:[#allocation2 + $0x48] sm:$0xff]
        %v1297 = vld [vmem:[#allocation2 + $0x50] sm:$0xff]
        %v1298 = vld [vmem:[#allocation2 + $0x58] sm:$0xff]
        %v1299 = vld [vmem:[#allocation2 + $0x60] sm:$0xff]
        %v1300 = vld [vmem:[#allocation2 + $0x68] sm:$0xff]
        %v1301 = vld [vmem:[#allocation2 + $0x70] sm:$0xff]
        %v1302 = vld [vmem:[#allocation2 + $0x78] sm:$0xff]
        %v1303 = vld [vmem:[#allocation2 + $0x80] sm:$0xff]
        %v1304 = vld [vmem:[#allocation2 + $0x88] sm:$0xff]
        %v1305 = vld [vmem:[#allocation2 + $0x90] sm:$0xff]
        %v1306 = vld [vmem:[#allocation2 + $0x98] sm:$0xff]
        %v1307 = vld [vmem:[#allocation2 + $0xa0] sm:$0xff]
        %v1308 = vld [vmem:[%s269] sm:$0x1]
        %vm1309 = vcmask 15360
        %v1311 = vsel %vm1309, %v1287, 0
        %v1314 = vsel %vm1309, %v1288, 0
        %v1317 = vsel %vm1309, %v1289, 0
        %v1320 = vsel %vm1309, %v1290, 0
        %v1323 = vsel %vm1309, %v1291, 0
        %v1326 = vsel %vm1309, %v1292, 0
        %v1329 = vsel %vm1309, %v1293, 0
        %v1332 = vsel %vm1309, %v1294, 0
        %v1335 = vsel %vm1309, %v1295, 0
        %v1338 = vsel %vm1309, %v1296, 0
        %v1341 = vsel %vm1309, %v1297, 0
        %v1344 = vsel %vm1309, %v1298, 0
        %v1347 = vsel %vm1309, %v1299, 0
        %v1350 = vsel %vm1309, %v1300, 0
        %v1353 = vsel %vm1309, %v1301, 0
        %v1356 = vsel %vm1309, %v1302, 0
        %v1359 = vsel %vm1309, %v1303, 0
        %v1362 = vsel %vm1309, %v1304, 0
        %v1365 = vsel %vm1309, %v1305, 0
        %v1368 = vsel %vm1309, %v1306, 0
        %v1371 = vsel %vm1309, %v1307, 0
        %vm1373 = vcmask 1040384
        %v1375 = vsel %vm1373, %v1308, 0
        %1377 = vmatprep.subr.bf16.mxu0 0
        %1378 = vmatpush1.bf16.msra.mxu0 %v1375
        %1379 = vmatprep.subr.bf16.mxu0 0
        %1380 = vmatpush1.bf16.msra.mxu0 0
        %1381 = vmatprep.subr.bf16.mxu0 0
        %1382 = vmatpush1.bf16.msra.mxu0 0
        %1383 = vmatprep.subr.bf16.mxu0 0
        %1384 = vmatpush1.bf16.msra.mxu0 0
        %1385 = vmatprep.subr.bf16.mxu0 0
        %1386 = vmatpush1.bf16.msra.mxu0 0
        %1387 = vmatprep.subr.bf16.mxu0 0
        %1388 = vmatpush1.bf16.msra.mxu0 0
        %1389 = vmatprep.subr.bf16.mxu0 0
        %1390 = vmatpush1.bf16.msra.mxu0 0
        %1391 = vmatprep.subr.bf16.mxu0 0
        %1392 = vmatpush1.bf16.msra.mxu0 0
        %1393 = vmatprep.subr.bf16.mxu0 0
        %1394 = vmatpush1.bf16.msra.mxu0 0
        %1395 = vmatprep.subr.bf16.mxu0 0
        %1396 = vmatpush1.bf16.msra.mxu0 0
        %1397 = vmatprep.subr.bf16.mxu0 0
        %1398 = vmatpush1.bf16.msra.mxu0 0
        %1399 = vmatprep.subr.bf16.mxu0 0
        %1400 = vmatpush1.bf16.msra.mxu0 0
        %1401 = vmatprep.subr.bf16.mxu0 0
        %1402 = vmatpush1.bf16.msra.mxu0 0
        %1403 = vmatprep.subr.bf16.mxu0 0
        %1404 = vmatpush1.bf16.msra.mxu0 0
        %1405 = vmatprep.subr.bf16.mxu0 0
        %1406 = vmatpush1.bf16.msra.mxu0 0
        %1407 = vmatprep.subr.bf16.mxu0 0
        %1408 = vmatpush1.bf16.msra.mxu0 0
        %1409 = vmatprep.mubr.bf16.mxu0 0
        %1410 = vmatmul.mubr.bf16.gmra.mrb[0].mxu0 %v1311
        %v1411 = vpop.f32.mrb[0].mxu0
        %v1412 = vadd.f32 0.0, %v1411
        %v1413 = vpop.f32.mrb[0].mxu0
        %v1414 = vpop.f32.mrb[0].mxu0
        %v1415 = vadd.f32 0.0, %v1414
        %v1416 = vpop.f32.mrb[0].mxu0
        %1417 = vmatprep.mubr.bf16.mxu0 0
        %1418 = vmatmul.mubr.bf16.gmra.mrb[0].mxu0 %v1314
        %v1419 = vpop.f32.mrb[0].mxu0
        %v1420 = vadd.f32 0.0, %v1419
        %v1421 = vpop.f32.mrb[0].mxu0
        %v1422 = vpop.f32.mrb[0].mxu0
        %v1423 = vadd.f32 0.0, %v1422
        %v1424 = vpop.f32.mrb[0].mxu0
        %1425 = vmatprep.mubr.bf16.mxu0 0
        %1426 = vmatmul.mubr.bf16.gmra.mrb[0].mxu0 %v1317
        %v1427 = vpop.f32.mrb[0].mxu0
        %v1428 = vadd.f32 0.0, %v1427
        %v1429 = vpop.f32.mrb[0].mxu0
        %v1430 = vpop.f32.mrb[0].mxu0
        %v1431 = vadd.f32 0.0, %v1430
        %v1432 = vpop.f32.mrb[0].mxu0
        %1433 = vmatprep.mubr.bf16.mxu0 0
        %1434 = vmatmul.mubr.bf16.gmra.mrb[0].mxu0 %v1320
        %v1435 = vpop.f32.mrb[0].mxu0
        %v1436 = vadd.f32 0.0, %v1435
        %v1437 = vpop.f32.mrb[0].mxu0
        %v1438 = vpop.f32.mrb[0].mxu0
        %v1439 = vadd.f32 0.0, %v1438
        %v1440 = vpop.f32.mrb[0].mxu0
        %1441 = vmatprep.mubr.bf16.mxu0 0
        %1442 = vmatmul.mubr.bf16.gmra.mrb[0].mxu0 %v1323
        %v1443 = vpop.f32.mrb[0].mxu0
        %v1444 = vadd.f32 0.0, %v1443
        %v1445 = vpop.f32.mrb[0].mxu0
        %v1446 = vpop.f32.mrb[0].mxu0
        %v1447 = vadd.f32 0.0, %v1446
        %v1448 = vpop.f32.mrb[0].mxu0
        %1449 = vmatprep.mubr.bf16.mxu0 0
        %1450 = vmatmul.mubr.bf16.gmra.mrb[0].mxu0 %v1326
        %v1451 = vpop.f32.mrb[0].mxu0
        %v1452 = vadd.f32 0.0, %v1451
        %v1453 = vpop.f32.mrb[0].mxu0
        %v1454 = vpop.f32.mrb[0].mxu0
        %v1455 = vadd.f32 0.0, %v1454
        %v1456 = vpop.f32.mrb[0].mxu0
        %1457 = vmatprep.mubr.bf16.mxu0 0
        %1458 = vmatmul.mubr.bf16.gmra.mrb[0].mxu0 %v1329
        %v1459 = vpop.f32.mrb[0].mxu0
        %v1460 = vadd.f32 0.0, %v1459
        %v1461 = vpop.f32.mrb[0].mxu0
        %v1462 = vpop.f32.mrb[0].mxu0
        %v1463 = vadd.f32 0.0, %v1462
        %v1464 = vpop.f32.mrb[0].mxu0
        %1465 = vmatprep.mubr.bf16.mxu0 0
        %1466 = vmatmul.mubr.bf16.gmra.mrb[0].mxu0 %v1332
        %v1467 = vpop.f32.mrb[0].mxu0
        %v1468 = vadd.f32 0.0, %v1467
        %v1469 = vpop.f32.mrb[0].mxu0
        %v1470 = vpop.f32.mrb[0].mxu0
        %v1471 = vadd.f32 0.0, %v1470
        %v1472 = vpop.f32.mrb[0].mxu0
        %1473 = vmatprep.mubr.bf16.mxu0 0
        %1474 = vmatmul.mubr.bf16.gmra.mrb[0].mxu0 %v1335
        %v1475 = vpop.f32.mrb[0].mxu0
        %v1476 = vadd.f32 0.0, %v1475
        %v1477 = vpop.f32.mrb[0].mxu0
        %v1478 = vpop.f32.mrb[0].mxu0
        %v1479 = vadd.f32 0.0, %v1478
        %v1480 = vpop.f32.mrb[0].mxu0
        %1481 = vmatprep.mubr.bf16.mxu0 0
        %1482 = vmatmul.mubr.bf16.gmra.mrb[0].mxu0 %v1338
        %v1483 = vpop.f32.mrb[0].mxu0
        %v1484 = vadd.f32 0.0, %v1483
        %v1485 = vpop.f32.mrb[0].mxu0
        %v1486 = vpop.f32.mrb[0].mxu0
        %v1487 = vadd.f32 0.0, %v1486
        %v1488 = vpop.f32.mrb[0].mxu0
        %1489 = vmatprep.mubr.bf16.mxu0 0
        %1490 = vmatmul.mubr.bf16.gmra.mrb[0].mxu0 %v1341
        %v1491 = vpop.f32.mrb[0].mxu0
        %v1492 = vadd.f32 0.0, %v1491
        %v1493 = vpop.f32.mrb[0].mxu0
        %v1494 = vpop.f32.mrb[0].mxu0
        %v1495 = vadd.f32 0.0, %v1494
        %v1496 = vpop.f32.mrb[0].mxu0
        %1497 = vmatprep.mubr.bf16.mxu0 0
        %1498 = vmatmul.mubr.bf16.gmra.mrb[0].mxu0 %v1344
        %v1499 = vpop.f32.mrb[0].mxu0
        %v1500 = vadd.f32 0.0, %v1499
        %v1501 = vpop.f32.mrb[0].mxu0
        %v1502 = vpop.f32.mrb[0].mxu0
        %v1503 = vadd.f32 0.0, %v1502
        %v1504 = vpop.f32.mrb[0].mxu0
        %1505 = vmatprep.mubr.bf16.mxu0 0
        %1506 = vmatmul.mubr.bf16.gmra.mrb[0].mxu0 %v1347
        %v1507 = vpop.f32.mrb[0].mxu0
        %v1508 = vadd.f32 0.0, %v1507
        %v1509 = vpop.f32.mrb[0].mxu0
        %v1510 = vpop.f32.mrb[0].mxu0
        %v1511 = vadd.f32 0.0, %v1510
        %v1512 = vpop.f32.mrb[0].mxu0
        %1513 = vmatprep.mubr.bf16.mxu0 0
        %1514 = vmatmul.mubr.bf16.gmra.mrb[0].mxu0 %v1350
        %v1515 = vpop.f32.mrb[0].mxu0
        %v1516 = vadd.f32 0.0, %v1515
        %v1517 = vpop.f32.mrb[0].mxu0
        %v1518 = vpop.f32.mrb[0].mxu0
        %v1519 = vadd.f32 0.0, %v1518
        %v1520 = vpop.f32.mrb[0].mxu0
        %1521 = vmatprep.mubr.bf16.mxu0 0
        %1522 = vmatmul.mubr.bf16.gmra.mrb[0].mxu0 %v1353
        %v1523 = vpop.f32.mrb[0].mxu0
        %v1524 = vadd.f32 0.0, %v1523
        %v1525 = vpop.f32.mrb[0].mxu0
        %v1526 = vpop.f32.mrb[0].mxu0
        %v1527 = vadd.f32 0.0, %v1526
        %v1528 = vpop.f32.mrb[0].mxu0
        %1529 = vmatprep.mubr.bf16.mxu0 0
        %1530 = vmatmul.mubr.bf16.gmra.mrb[0].mxu0 %v1356
        %v1531 = vpop.f32.mrb[0].mxu0
        %v1532 = vadd.f32 0.0, %v1531
        %v1533 = vpop.f32.mrb[0].mxu0
        %v1534 = vpop.f32.mrb[0].mxu0
        %v1535 = vadd.f32 0.0, %v1534
        %v1536 = vpop.f32.mrb[0].mxu0
        %1537 = vmatprep.mubr.bf16.mxu0 0
        %1538 = vmatmul.mubr.bf16.gmra.mrb[0].mxu0 %v1359
        %v1539 = vpop.f32.mrb[0].mxu0
        %v1540 = vadd.f32 0.0, %v1539
        %v1541 = vpop.f32.mrb[0].mxu0
        %v1542 = vpop.f32.mrb[0].mxu0
        %v1543 = vadd.f32 0.0, %v1542
        %v1544 = vpop.f32.mrb[0].mxu0
        %1545 = vmatprep.mubr.bf16.mxu0 0
        %1546 = vmatmul.mubr.bf16.gmra.mrb[0].mxu0 %v1362
        %v1547 = vpop.f32.mrb[0].mxu0
        %v1548 = vadd.f32 0.0, %v1547
        %v1549 = vpop.f32.mrb[0].mxu0
        %v1550 = vpop.f32.mrb[0].mxu0
        %v1551 = vadd.f32 0.0, %v1550
        %v1552 = vpop.f32.mrb[0].mxu0
        %1553 = vmatprep.mubr.bf16.mxu0 0
        %1554 = vmatmul.mubr.bf16.gmra.mrb[0].mxu0 %v1365
        %v1555 = vpop.f32.mrb[0].mxu0
        %v1556 = vadd.f32 0.0, %v1555
        %v1557 = vpop.f32.mrb[0].mxu0
        %v1558 = vpop.f32.mrb[0].mxu0
        %v1559 = vadd.f32 0.0, %v1558
        %v1560 = vpop.f32.mrb[0].mxu0
        %1561 = vmatprep.mubr.bf16.mxu0 0
        %1562 = vmatmul.mubr.bf16.gmra.mrb[0].mxu0 %v1368
        %v1563 = vpop.f32.mrb[0].mxu0
        %v1564 = vadd.f32 0.0, %v1563
        %v1565 = vpop.f32.mrb[0].mxu0
        %v1566 = vpop.f32.mrb[0].mxu0
        %v1567 = vadd.f32 0.0, %v1566
        %v1568 = vpop.f32.mrb[0].mxu0
        %1569 = vmatprep.mubr.bf16.mxu0 0
        %1570 = vmatmul.mubr.bf16.gmra.mrb[0].mxu0 %v1371
        %v1571 = vpop.f32.mrb[0].mxu0
        %v1572 = vadd.f32 0.0, %v1571
        %v1573 = vpop.f32.mrb[0].mxu0
        %v1574 = vpop.f32.mrb[0].mxu0
        %v1575 = vadd.f32 0.0, %v1574
        %v1576 = vpop.f32.mrb[0].mxu0
        %1577 = vdwg.mxu0
        %vm1578 = vcmask 130048
        %v1579 = vsel %vm1578, %v1412, -inf
        %v1580 = vsel %vm1578, %v1420, -inf
        %v1581 = vsel %vm1578, %v1428, -inf
        %v1582 = vmax.f32 %v1579, %v1581
        %v1583 = vsel %vm1578, %v1436, -inf
        %v1584 = vmax.f32 %v1580, %v1583
        %v1585 = vsel %vm1578, %v1444, -inf
        %v1586 = vmax.f32 %v1582, %v1585
        %v1587 = vsel %vm1578, %v1452, -inf
        %v1588 = vmax.f32 %v1584, %v1587
        %v1589 = vsel %vm1578, %v1460, -inf
        %v1590 = vmax.f32 %v1586, %v1589
        %v1591 = vsel %vm1578, %v1468, -inf
        %v1592 = vmax.f32 %v1588, %v1591
        %v1593 = vsel %vm1578, %v1476, -inf
        %v1594 = vmax.f32 %v1590, %v1593
        %v1595 = vsel %vm1578, %v1484, -inf
        %v1596 = vmax.f32 %v1592, %v1595
        %v1597 = vsel %vm1578, %v1492, -inf
        %v1598 = vmax.f32 %v1594, %v1597
        %v1599 = vsel %vm1578, %v1500, -inf
        %v1600 = vmax.f32 %v1596, %v1599
        %v1601 = vsel %vm1578, %v1508, -inf
        %v1602 = vmax.f32 %v1598, %v1601
        %v1603 = vsel %vm1578, %v1516, -inf
        %v1604 = vmax.f32 %v1600, %v1603
        %v1605 = vsel %vm1578, %v1524, -inf
        %v1606 = vmax.f32 %v1602, %v1605
        %v1607 = vsel %vm1578, %v1532, -inf
        %v1608 = vmax.f32 %v1604, %v1607
        %v1609 = vsel %vm1578, %v1540, -inf
        %v1610 = vmax.f32 %v1606, %v1609
        %v1611 = vsel %vm1578, %v1548, -inf
        %v1612 = vmax.f32 %v1608, %v1611
        %v1613 = vsel %vm1578, %v1556, -inf
        %v1614 = vmax.f32 %v1610, %v1613
        %v1615 = vmax.f32 %v1614, %v1612
        %v1616 = vsel %vm1578, %v1415, -inf
        %v1617 = vsel %vm1578, %v1423, -inf
        %v1618 = vsel %vm1578, %v1431, -inf
        %v1619 = vmax.f32 %v1616, %v1618
        %v1620 = vsel %vm1578, %v1439, -inf
        %v1621 = vmax.f32 %v1617, %v1620
        %v1622 = vsel %vm1578, %v1447, -inf
        %v1623 = vmax.f32 %v1619, %v1622
        %v1624 = vsel %vm1578, %v1455, -inf
        %v1625 = vmax.f32 %v1621, %v1624
        %v1626 = vsel %vm1578, %v1463, -inf
        %v1627 = vmax.f32 %v1623, %v1626
        %v1628 = vsel %vm1578, %v1471, -inf
        %v1629 = vmax.f32 %v1625, %v1628
        %v1630 = vsel %vm1578, %v1479, -inf
        %v1631 = vmax.f32 %v1627, %v1630
        %v1632 = vsel %vm1578, %v1487, -inf
        %v1633 = vmax.f32 %v1629, %v1632
        %v1634 = vsel %vm1578, %v1495, -inf
        %v1635 = vmax.f32 %v1631, %v1634
        %v1636 = vsel %vm1578, %v1503, -inf
        %v1637 = vmax.f32 %v1633, %v1636
        %v1638 = vsel %vm1578, %v1511, -inf
        %v1639 = vmax.f32 %v1635, %v1638
        %v1640 = vsel %vm1578, %v1519, -inf
        %v1641 = vmax.f32 %v1637, %v1640
        %v1642 = vsel %vm1578, %v1527, -inf
        %v1643 = vmax.f32 %v1639, %v1642
        %v1644 = vsel %vm1578, %v1535, -inf
        %v1645 = vmax.f32 %v1641, %v1644
        %v1646 = vsel %vm1578, %v1543, -inf
        %v1647 = vmax.f32 %v1643, %v1646
        %v1648 = vsel %vm1578, %v1551, -inf
        %v1649 = vmax.f32 %v1645, %v1648
        %v1650 = vsel %vm1578, %v1559, -inf
        %v1651 = vmax.f32 %v1647, %v1650
        %v1652 = vmax.f32 %v1651, %v1649
        %v1653 = vsub.f32 %v1412, %v1615
        %v1654 = vsub.f32 %v1415, %v1652
        %v1655 = vsub.f32 %v1420, %v1615
        %v1656 = vsub.f32 %v1423, %v1652
        %v1657 = vsub.f32 %v1428, %v1615
        %v1658 = vsub.f32 %v1431, %v1652
        %v1659 = vsub.f32 %v1436, %v1615
        %v1660 = vsub.f32 %v1439, %v1652
        %v1661 = vsub.f32 %v1444, %v1615
        %v1662 = vsub.f32 %v1447, %v1652
        %v1663 = vsub.f32 %v1452, %v1615
        %v1664 = vsub.f32 %v1455, %v1652
        %v1665 = vsub.f32 %v1460, %v1615
        %v1666 = vsub.f32 %v1463, %v1652
        %v1667 = vsub.f32 %v1468, %v1615
        %v1668 = vsub.f32 %v1471, %v1652
        %v1669 = vsub.f32 %v1476, %v1615
        %v1670 = vsub.f32 %v1479, %v1652
        %v1671 = vsub.f32 %v1484, %v1615
        %v1672 = vsub.f32 %v1487, %v1652
        %v1673 = vsub.f32 %v1492, %v1615
        %v1674 = vsub.f32 %v1495, %v1652
        %v1675 = vsub.f32 %v1500, %v1615
        %v1676 = vsub.f32 %v1503, %v1652
        %v1677 = vsub.f32 %v1508, %v1615
        %v1678 = vsub.f32 %v1511, %v1652
        %v1679 = vsub.f32 %v1516, %v1615
        %v1680 = vsub.f32 %v1519, %v1652
        %v1681 = vsub.f32 %v1524, %v1615
        %v1682 = vsub.f32 %v1527, %v1652
        %v1683 = vsub.f32 %v1532, %v1615
        %v1684 = vsub.f32 %v1535, %v1652
        %v1685 = vsub.f32 %v1540, %v1615
        %v1686 = vsub.f32 %v1543, %v1652
        %v1687 = vsub.f32 %v1548, %v1615
        %v1688 = vsub.f32 %v1551, %v1652
        %v1689 = vsub.f32 %v1556, %v1615
        %v1690 = vsub.f32 %v1559, %v1652
        %v1691 = vmul.f32 %v1653, 1.442695
        %v1692 = vpow.pop %v1691
        %v1693 = vmul.f32 %v1654, 1.442695
        %v1694 = vpow.pop %v1693
        %v1695 = vmul.f32 %v1655, 1.442695
        %v1696 = vpow.pop %v1695
        %v1697 = vmul.f32 %v1656, 1.442695
        %v1698 = vpow.pop %v1697
        %v1699 = vmul.f32 %v1657, 1.442695
        %v1700 = vpow.pop %v1699
        %v1701 = vmul.f32 %v1658, 1.442695
        %v1702 = vpow.pop %v1701
        %v1703 = vmul.f32 %v1659, 1.442695
        %v1704 = vpow.pop %v1703
        %v1705 = vmul.f32 %v1660, 1.442695
        %v1706 = vpow.pop %v1705
        %v1707 = vmul.f32 %v1661, 1.442695
        %v1708 = vpow.pop %v1707
        %v1709 = vmul.f32 %v1662, 1.442695
        %v1710 = vpow.pop %v1709
        %v1711 = vmul.f32 %v1663, 1.442695
        %v1712 = vpow.pop %v1711
        %v1713 = vmul.f32 %v1664, 1.442695
        %v1714 = vpow.pop %v1713
        %v1715 = vmul.f32 %v1665, 1.442695
        %v1716 = vpow.pop %v1715
        %v1717 = vmul.f32 %v1666, 1.442695
        %v1718 = vpow.pop %v1717
        %v1719 = vmul.f32 %v1667, 1.442695
        %v1720 = vpow.pop %v1719
        %v1721 = vmul.f32 %v1668, 1.442695
        %v1722 = vpow.pop %v1721
        %v1723 = vmul.f32 %v1669, 1.442695
        %v1724 = vpow.pop %v1723
        %v1725 = vmul.f32 %v1670, 1.442695
        %v1726 = vpow.pop %v1725
        %v1727 = vmul.f32 %v1671, 1.442695
        %v1728 = vpow.pop %v1727
        %v1729 = vmul.f32 %v1672, 1.442695
        %v1730 = vpow.pop %v1729
        %v1731 = vmul.f32 %v1673, 1.442695
        %v1732 = vpow.pop %v1731
        %v1733 = vmul.f32 %v1674, 1.442695
        %v1734 = vpow.pop %v1733
        %v1735 = vmul.f32 %v1675, 1.442695
        %v1736 = vpow.pop %v1735
        %v1737 = vmul.f32 %v1676, 1.442695
        %v1738 = vpow.pop %v1737
        %v1739 = vmul.f32 %v1677, 1.442695
        %v1740 = vpow.pop %v1739
        %v1741 = vmul.f32 %v1678, 1.442695
        %v1742 = vpow.pop %v1741
        %v1743 = vmul.f32 %v1679, 1.442695
        %v1744 = vpow.pop %v1743
        %v1745 = vmul.f32 %v1680, 1.442695
        %v1746 = vpow.pop %v1745
        %v1747 = vmul.f32 %v1681, 1.442695
        %v1748 = vpow.pop %v1747
        %v1749 = vmul.f32 %v1682, 1.442695
        %v1750 = vpow.pop %v1749
        %v1751 = vmul.f32 %v1683, 1.442695
        %v1752 = vpow.pop %v1751
        %v1753 = vmul.f32 %v1684, 1.442695
        %v1754 = vpow.pop %v1753
        %v1755 = vmul.f32 %v1685, 1.442695
        %v1756 = vpow.pop %v1755
        %v1757 = vmul.f32 %v1686, 1.442695
        %v1758 = vpow.pop %v1757
        %v1759 = vmul.f32 %v1687, 1.442695
        %v1760 = vpow.pop %v1759
        %v1761 = vmul.f32 %v1688, 1.442695
        %v1762 = vpow.pop %v1761
        %v1763 = vmul.f32 %v1689, 1.442695
        %v1764 = vpow.pop %v1763
        %v1765 = vmul.f32 %v1690, 1.442695
        %v1766 = vpow.pop %v1765
        %v1767 = vsel %vm1578, %v1692, 0.0
        %v1768 = vsel %vm1578, %v1696, 0.0
        %v1769 = vadd.f32 %v1767, %v1768
        %v1770 = vsel %vm1578, %v1700, 0.0
        %v1771 = vadd.f32 %v1769, %v1770
        %v1772 = vsel %vm1578, %v1704, 0.0
        %v1773 = vadd.f32 %v1771, %v1772
        %v1774 = vsel %vm1578, %v1708, 0.0
        %v1775 = vadd.f32 %v1773, %v1774
        %v1776 = vsel %vm1578, %v1712, 0.0
        %v1777 = vadd.f32 %v1775, %v1776
        %v1778 = vsel %vm1578, %v1716, 0.0
        %v1779 = vadd.f32 %v1777, %v1778
        %v1780 = vsel %vm1578, %v1720, 0.0
        %v1781 = vadd.f32 %v1779, %v1780
        %v1782 = vsel %vm1578, %v1724, 0.0
        %v1783 = vadd.f32 %v1781, %v1782
        %v1784 = vsel %vm1578, %v1728, 0.0
        %v1785 = vadd.f32 %v1783, %v1784
        %v1786 = vsel %vm1578, %v1732, 0.0
        %v1787 = vadd.f32 %v1785, %v1786
        %v1788 = vsel %vm1578, %v1736, 0.0
        %v1789 = vadd.f32 %v1787, %v1788
        %v1790 = vsel %vm1578, %v1740, 0.0
        %v1791 = vadd.f32 %v1789, %v1790
        %v1792 = vsel %vm1578, %v1744, 0.0
        %v1793 = vadd.f32 %v1791, %v1792
        %v1794 = vsel %vm1578, %v1748, 0.0
        %v1795 = vadd.f32 %v1793, %v1794
        %v1796 = vsel %vm1578, %v1752, 0.0
        %v1797 = vadd.f32 %v1795, %v1796
        %v1798 = vsel %vm1578, %v1756, 0.0
        %v1799 = vadd.f32 %v1797, %v1798
        %v1800 = vsel %vm1578, %v1760, 0.0
        %v1801 = vadd.f32 %v1799, %v1800
        %v1802 = vsel %vm1578, %v1764, 0.0
        %v1803 = vadd.f32 %v1801, %v1802
        %v1804 = vsel %vm1578, %v1694, 0.0
        %v1805 = vsel %vm1578, %v1698, 0.0
        %v1806 = vadd.f32 %v1804, %v1805
        %v1807 = vsel %vm1578, %v1702, 0.0
        %v1808 = vadd.f32 %v1806, %v1807
        %v1809 = vsel %vm1578, %v1706, 0.0
        %v1810 = vadd.f32 %v1808, %v1809
        %v1811 = vsel %vm1578, %v1710, 0.0
        %v1812 = vadd.f32 %v1810, %v1811
        %v1813 = vsel %vm1578, %v1714, 0.0
        %v1814 = vadd.f32 %v1812, %v1813
        %v1815 = vsel %vm1578, %v1718, 0.0
        %v1816 = vadd.f32 %v1814, %v1815
        %v1817 = vsel %vm1578, %v1722, 0.0
        %v1818 = vadd.f32 %v1816, %v1817
        %v1819 = vsel %vm1578, %v1726, 0.0
        %v1820 = vadd.f32 %v1818, %v1819
        %v1821 = vsel %vm1578, %v1730, 0.0
        %v1822 = vadd.f32 %v1820, %v1821
        %v1823 = vsel %vm1578, %v1734, 0.0
        %v1824 = vadd.f32 %v1822, %v1823
        %v1825 = vsel %vm1578, %v1738, 0.0
        %v1826 = vadd.f32 %v1824, %v1825
        %v1827 = vsel %vm1578, %v1742, 0.0
        %v1828 = vadd.f32 %v1826, %v1827
        %v1829 = vsel %vm1578, %v1746, 0.0
        %v1830 = vadd.f32 %v1828, %v1829
        %v1831 = vsel %vm1578, %v1750, 0.0
        %v1832 = vadd.f32 %v1830, %v1831
        %v1833 = vsel %vm1578, %v1754, 0.0
        %v1834 = vadd.f32 %v1832, %v1833
        %v1835 = vsel %vm1578, %v1758, 0.0
        %v1836 = vadd.f32 %v1834, %v1835
        %v1837 = vsel %vm1578, %v1762, 0.0
        %v1838 = vadd.f32 %v1836, %v1837
        %v1839 = vsel %vm1578, %v1766, 0.0
        %v1840 = vadd.f32 %v1838, %v1839
        %v1841 = vlog2.pop %v1803
        %v1842 = vmul.f32 %v1841, 0.6931472
        %v1843 = vlog2.pop %v1840
        %v1844 = vmul.f32 %v1843, 0.6931472
        %v1845 = vadd.f32 %v1615, %v1842
        %v1846 = vadd.f32 %v1652, %v1844
        %v1847 = vsub.f32 %v1412, %v1845
        %v1848 = vsub.f32 %v1415, %v1846
        %v1849 = vsub.f32 %v1420, %v1845
        %v1850 = vsub.f32 %v1423, %v1846
        %v1851 = vsub.f32 %v1428, %v1845
        %v1852 = vsub.f32 %v1431, %v1846
        %v1853 = vsub.f32 %v1436, %v1845
        %v1854 = vsub.f32 %v1439, %v1846
        %v1855 = vsub.f32 %v1444, %v1845
        %v1856 = vsub.f32 %v1447, %v1846
        %v1857 = vsub.f32 %v1452, %v1845
        %v1858 = vsub.f32 %v1455, %v1846
        %v1859 = vsub.f32 %v1460, %v1845
        %v1860 = vsub.f32 %v1463, %v1846
        %v1861 = vsub.f32 %v1468, %v1845
        %v1862 = vsub.f32 %v1471, %v1846
        %v1863 = vsub.f32 %v1476, %v1845
        %v1864 = vsub.f32 %v1479, %v1846
        %v1865 = vsub.f32 %v1484, %v1845
        %v1866 = vsub.f32 %v1487, %v1846
        %v1867 = vsub.f32 %v1492, %v1845
        %v1868 = vsub.f32 %v1495, %v1846
        %v1869 = vsub.f32 %v1500, %v1845
        %v1870 = vsub.f32 %v1503, %v1846
        %v1871 = vsub.f32 %v1508, %v1845
        %v1872 = vsub.f32 %v1511, %v1846
        %v1873 = vsub.f32 %v1516, %v1845
        %v1874 = vsub.f32 %v1519, %v1846
        %v1875 = vsub.f32 %v1524, %v1845
        %v1876 = vsub.f32 %v1527, %v1846
        %v1877 = vsub.f32 %v1532, %v1845
        %v1878 = vsub.f32 %v1535, %v1846
        %v1879 = vsub.f32 %v1540, %v1845
        %v1880 = vsub.f32 %v1543, %v1846
        %v1881 = vsub.f32 %v1548, %v1845
        %v1882 = vsub.f32 %v1551, %v1846
        %v1883 = vsub.f32 %v1556, %v1845
        %v1884 = vsub.f32 %v1559, %v1846
        %1885 = vst.msk [vmem:[%s281] sm:$0xff] %vm1578, %v1847
        %1886 = vst.msk [vmem:[%s281 + $0x8] sm:$0xff] %vm1578, %v1848
        %1887 = vst.msk [vmem:[%s281 + $0x10] sm:$0xff] %vm1578, %v1849
        %1888 = vst.msk [vmem:[%s281 + $0x18] sm:$0xff] %vm1578, %v1850
        %1889 = vst.msk [vmem:[%s281 + $0x20] sm:$0xff] %vm1578, %v1851
        %1890 = vst.msk [vmem:[%s281 + $0x28] sm:$0xff] %vm1578, %v1852
        %1891 = vst.msk [vmem:[%s281 + $0x30] sm:$0xff] %vm1578, %v1853
        %1892 = vst.msk [vmem:[%s281 + $0x38] sm:$0xff] %vm1578, %v1854
        %1893 = vst.msk [vmem:[%s281 + $0x40] sm:$0xff] %vm1578, %v1855
        %1894 = vst.msk [vmem:[%s281 + $0x48] sm:$0xff] %vm1578, %v1856
        %1895 = vst.msk [vmem:[%s281 + $0x50] sm:$0xff] %vm1578, %v1857
        %1896 = vst.msk [vmem:[%s281 + $0x58] sm:$0xff] %vm1578, %v1858
        %1897 = vst.msk [vmem:[%s281 + $0x60] sm:$0xff] %vm1578, %v1859
        %1898 = vst.msk [vmem:[%s281 + $0x68] sm:$0xff] %vm1578, %v1860
        %1899 = vst.msk [vmem:[%s281 + $0x70] sm:$0xff] %vm1578, %v1861
        %1900 = vst.msk [vmem:[%s281 + $0x78] sm:$0xff] %vm1578, %v1862
        %1901 = vst.msk [vmem:[%s281 + $0x80] sm:$0xff] %vm1578, %v1863
        %1902 = vst.msk [vmem:[%s281 + $0x88] sm:$0xff] %vm1578, %v1864
        %1903 = vst.msk [vmem:[%s281 + $0x90] sm:$0xff] %vm1578, %v1865
        %1904 = vst.msk [vmem:[%s281 + $0x98] sm:$0xff] %vm1578, %v1866
        %1905 = vst.msk [vmem:[%s281 + $0xa0] sm:$0xff] %vm1578, %v1867
        %1906 = vst.msk [vmem:[%s281 + $0xa8] sm:$0xff] %vm1578, %v1868
        %1907 = vst.msk [vmem:[%s281 + $0xb0] sm:$0xff] %vm1578, %v1869
        %1908 = vst.msk [vmem:[%s281 + $0xb8] sm:$0xff] %vm1578, %v1870
        %1909 = vst.msk [vmem:[%s281 + $0xc0] sm:$0xff] %vm1578, %v1871
        %1910 = vst.msk [vmem:[%s281 + $0xc8] sm:$0xff] %vm1578, %v1872
        %1911 = vst.msk [vmem:[%s281 + $0xd0] sm:$0xff] %vm1578, %v1873
        %1912 = vst.msk [vmem:[%s281 + $0xd8] sm:$0xff] %vm1578, %v1874
        %1913 = vst.msk [vmem:[%s281 + $0xe0] sm:$0xff] %vm1578, %v1875
        %1914 = vst.msk [vmem:[%s281 + $0xe8] sm:$0xff] %vm1578, %v1876
        %1915 = vst.msk [vmem:[%s281 + $0xf0] sm:$0xff] %vm1578, %v1877
        %1916 = vst.msk [vmem:[%s281 + $0xf8] sm:$0xff] %vm1578, %v1878
        %1917 = vst.msk [vmem:[%s281 + $0x100] sm:$0xff] %vm1578, %v1879
        %1918 = vst.msk [vmem:[%s281 + $0x108] sm:$0xff] %vm1578, %v1880
        %1919 = vst.msk [vmem:[%s281 + $0x110] sm:$0xff] %vm1578, %v1881
        %1920 = vst.msk [vmem:[%s281 + $0x118] sm:$0xff] %vm1578, %v1882
        %1921 = vst.msk [vmem:[%s281 + $0x120] sm:$0xff] %vm1578, %v1883
        %1922 = vst.msk [vmem:[%s281 + $0x128] sm:$0xff] %vm1578, %v1884
        %s1923 = sld [smem:[#allocation3]]
        %v1924 = vstv %s1923
        %v1925 = vadd.f32 %v1564, %v1924
        %v1926 = vadd.f32 %v1567, %v1924
        %s1927 = scalar_lea.vmem %s281, 304
        %1928 = vst.msk [vmem:[%s1927] sm:$0xff] %vm1578, %v1925
        %1929 = vst.msk [vmem:[%s1927 + $0x8] sm:$0xff] %vm1578, %v1926
        %s1930 = sld [smem:[#allocation3 + $0x1]]
        %v1931 = vstv %s1930
        %v1932 = vadd.f32 %v1572, %v1931
        %v1933 = vadd.f32 %v1575, %v1931
        %s1934 = scalar_lea.vmem %s281, 320
        %1935 = vst.msk [vmem:[%s1934] sm:$0xff] %vm1578, %v1932
        %1936 = vst.msk [vmem:[%s1934 + $0x8] sm:$0xff] %vm1578, %v1933
        %s1937 = smul.u32 2, %s22
        %p1938 = scmp.lt.s32.totalorder %s21, 1
        %s1939 = scalar_select %p1938, %s21, 1
        %p1940 = scmp.lt.s32.totalorder %s1937, 1
        %s1941 = scalar_select %p1940, %s1937, 1
        %p1942 = scmp.lt.s32.totalorder %s23, 0
        %s1943 = scalar_select %p1942, %s23, 0
        %s1944 = sadd.s32 %s1943, %s1941
        %s1945 = smul.addr %s1939, 42
        %s1946 = sadd.s32 %s1944, %s1945
        %s1947 = smul.addr %s1946, 8
        %s1948 = scalar_lea.vmem %s4, %s1947
        // Predicated region
        $region45: #{drn_instance_forward.3} parent=35 // pred_check
          %p1949 = pneg %p156
        $region46: #{drn_instance_forward.3} parent=35 // pred_check_branch
          %1951 = sbr.rel (%p1949) target = $region48
        $region47: #{drn_instance_forward.3} parent=35 // pred_region
          %s1952 = smul.u32 2, %s22
        $region48: #{drn_instance_forward.3} parent=35 // pred_fallthru
          _
      $region36: #{drn_instance_forward.3} parent=5 // pred_fallthru
        _
      %p1953 = scmp.le.s32.totalorder 2, %s11
      // Predicated region
      $region49: #{drn_instance_forward.3} parent=5 // pred_check
        %p1954 = pneg %p1953
      $region50: #{drn_instance_forward.3} parent=5 // pred_check_branch
        %1956 = sbr.rel (%p1954) target = $region52
      $region51: #{drn_instance_forward.3} parent=5 // pred_region
        %s1957 = ssub.s32 %s11, 2
        // Predicated region
        $region53: #{drn_instance_forward.3} parent=51 // pred_check
          %p1958 = pneg %p162
        $region54: #{drn_instance_forward.3} parent=51 // pred_check_branch
          %1960 = sbr.rel (%p1958) target = $region56
        $region55: #{drn_instance_forward.3} parent=51 // pred_region
          %s1961 = smul.u32 2, %s25
          %p1962 = scmp.lt.s32.totalorder %s24, 1
          %s1963 = scalar_select %p1962, %s24, 1
          %p1964 = scmp.lt.s32.totalorder %s1961, 1
          %s1965 = scalar_select %p1964, %s1961, 1
          %p1966 = scmp.lt.s32.totalorder %s26, 0
          %s1967 = scalar_select %p1966, %s26, 0
          %s1968 = sadd.s32 %s1967, %s1965
          %s1969 = smul.addr %s1963, 42
          %s1970 = sadd.s32 %s1968, %s1969
          %s1971 = smul.addr %s1970, 8
          %s1972 = scalar_lea.vmem %s4, %s1971
        $region56: #{drn_instance_forward.3} parent=51 // pred_fallthru
          _
      $region52: #{drn_instance_forward.3} parent=5 // pred_fallthru
        _
    $region6: #{drn_instance_forward.3} parent=1 // loop_footer
      %s15 = sadd.s32 1, %s11
    $region7: #{drn_instance_forward.3} parent=1 // loop_footer_branch
      %10 = sbr.rel target = $region3
    $region8: #{drn_instance_forward.3} parent=1 // loop_exit
      _
    %1973 = vsyncpa [#allocation4], 1
    %s1974 = scalar_lea.sflag [#allocation4], 1
    %1975 = vsyncpa %s1974, 1

</llo_original>
